<compile_context>
chip_gen: v6e
topology: v6e:2x2x1
jax: 0.10.0
libtpu: 0.0.40
codegen_flags: <defaults>
</compile_context>

<pallas_src>
import functools

import jax
import jax.numpy as jnp
from jax.experimental import pallas as pl
from jax.experimental.pallas import tpu as pltpu


# -----------------------------------------------------------------------------
# Build-time capability / hardware probes (cached; never wrap real execution)
# -----------------------------------------------------------------------------
@functools.lru_cache(maxsize=1)
def _buffered_weights_supported() -> bool:
    """Can this JAX build single-buffer a grid-constant input via
    pipeline_mode=pl.Buffered(1)?  AOT-compiles a tiny throwaway kernel once."""
    if not hasattr(pl, "Buffered"):
        return False
    try:
        w_spec = pl.BlockSpec((8, 128), lambda i: (0, 0),
                              pipeline_mode=pl.Buffered(1))

        def _probe_kernel(w_ref, o_ref):
            o_ref[...] = w_ref[...] * 2.0

        fn = pl.pallas_call(
            _probe_kernel,
            out_shape=jax.ShapeDtypeStruct((16, 128), jnp.float32),
            grid_spec=pltpu.PrefetchScalarGridSpec(
                num_scalar_prefetch=0,
                grid=(2,),
                in_specs=[w_spec],
                out_specs=pl.BlockSpec((8, 128), lambda i: (i, 0)),
            ),
        )
        jax.jit(fn).lower(
            jax.ShapeDtypeStruct((8, 128), jnp.float32)).compile()
        return True
    except Exception:
        return False


@functools.lru_cache(maxsize=1)
def _vmem_capacity_bytes() -> int:
    try:
        return int(pltpu.get_tpu_info().vmem_capacity_bytes)
    except Exception:
        return 64 * 1024 * 1024  # conservative (v7x-sized) fallback


def _pick_block_batch(batch, seq, *, target_rows=256, min_steps=4):
    """Largest-rows-per-step batch block that still leaves enough grid steps.

    Targets bb*seq >= target_rows (MXU row occupancy) while keeping
    batch // bb >= min_steps when possible (v7x shards the parallel grid axis
    across 2 TensorCores; each core still needs >= 2 steps to pipeline DMAs).
    """
    divisors = [d for d in range(1, batch + 1) if batch % d == 0]
    for d in divisors:                      # smallest bb hitting the row target
        if d * seq >= target_rows and batch // d >= min_steps:
            return d
    for d in divisors:
        if d * seq >= target_rows and batch // d >= 2:
            return d
    for d in reversed(divisors):            # otherwise biggest bb with >=2 steps
        if batch // d >= 2:
            return d
    return batch


# -----------------------------------------------------------------------------
# Kernel
# -----------------------------------------------------------------------------
def _layer_norm(x, gamma, beta, eps=1e-5):
    # f32 VPU math (v5e-safe)
    mu = jnp.mean(x, axis=-1, keepdims=True)
    var = jnp.mean((x - mu) ** 2, axis=-1, keepdims=True)
    return (x - mu) * jax.lax.rsqrt(var + eps) * gamma + beta


def _block_kernel(x_ref,
                  g1_ref, be1_ref,
                  wqkv_ref, bqkv_ref,
                  wp_ref, bp_ref,
                  g2_ref, be2_ref,
                  w1_ref, b1_ref, w2_ref, b2_ref,
                  o_ref,
                  ctx_ref,
                  *, num_heads, head_size):
    bb, T, D = x_ref.shape
    NHH = num_heads * head_size

    x = x_ref[...].reshape(bb * T, D)                       # (rows, D) f32

    # ---- x = x + MHA(LN1(x)) ----
    xn = _layer_norm(x, g1_ref[...], be1_ref[...])

    # fused Q|K|V projection: one wide matmul, bf16 in / f32 accumulate
    qkv = jnp.dot(xn.astype(jnp.bfloat16), wqkv_ref[...],
                  preferred_element_type=jnp.float32) + bqkv_ref[...]
    qkv = qkv.reshape(bb, T, 3 * NHH)                       # cheap leading-dim split

    scale = 1.0 / (float(head_size) ** 0.5)
    # TODO(synk): replace static unroll with a head-batched einsum / head grid
    #             axis for num_heads >= 8 (vreg live-range pressure).
    for h in range(num_heads):                              # static unroll over heads
        lo = h * head_size
        q = qkv[:, :, lo:lo + head_size].astype(jnp.bfloat16)
        k = qkv[:, :, NHH + lo:NHH + lo + head_size].astype(jnp.bfloat16)
        v = qkv[:, :, 2 * NHH + lo:2 * NHH + lo + head_size].astype(jnp.bfloat16)
        s = jnp.einsum('btd,bsd->bts', q, k,
                       preferred_element_type=jnp.float32) * scale      # (bb, T, T)
        s = s - jnp.max(s, axis=-1, keepdims=True)
        p = jnp.exp(s)
        p = p * pl.reciprocal(jnp.sum(p, axis=-1, keepdims=True), approx=True)
        ctx = jnp.einsum('bts,bsd->btd', p.astype(jnp.bfloat16), v,
                         preferred_element_type=jnp.float32)            # (bb, T, hd)
        # head output -> VMEM scratch at static lane offset (no concatenate)
        ctx_ref[:, :, lo:lo + head_size] = ctx.astype(ctx_ref.dtype)

    cat = ctx_ref[...].reshape(bb * T, NHH)                 # bf16
    sa = jnp.dot(cat, wp_ref[...], preferred_element_type=jnp.float32) + bp_ref[...]
    x1 = x + sa

    # ---- x = x + FFN(LN2(x)) ----
    x1n = _layer_norm(x1, g2_ref[...], be2_ref[...])
    h1 = jnp.dot(x1n.astype(jnp.bfloat16), w1_ref[...],
                 preferred_element_type=jnp.float32) + b1_ref[...]
    h1 = jnp.where(h1 > 0, h1, 0.01 * h1)                   # LeakyReLU(0.01), f32
    h2 = jnp.dot(h1.astype(jnp.bfloat16), w2_ref[...],
                 preferred_element_type=jnp.float32) + b2_ref[...]

    o_ref[...] = (x1 + h2).reshape(bb, T, D).astype(o_ref.dtype)


# -----------------------------------------------------------------------------
# Wrapper
# -----------------------------------------------------------------------------
def prepare_block_params(params):
    """One-time weight prep, hoisted out of the forward path: fuses Q|K|V into a
    single (D, 3*NHH) matmul weight and casts matmul weights to bf16 (halves
    HBM->VMEM DMA); biases / LayerNorm params stay f32."""
    f32, bf16 = jnp.float32, jnp.bfloat16
    return {
        "ln1_g": params["ln1_g"].astype(f32), "ln1_b": params["ln1_b"].astype(f32),
        "w_qkv": jnp.concatenate(
            [params["wq"], params["wk"], params["wv"]], axis=1).astype(bf16),
        "b_qkv": jnp.concatenate(
            [params["bq"], params["bk"], params["bv"]], axis=1).astype(f32),
        "wp": params["wp"].astype(bf16), "bp": params["bp"].astype(f32),
        "ln2_g": params["ln2_g"].astype(f32), "ln2_b": params["ln2_b"].astype(f32),
        "w1": params["w1"].astype(bf16), "b1": params["b1"].astype(f32),
        "w2": params["w2"].astype(bf16), "b2": params["b2"].astype(f32),
    }


def vit_block(x, prepared, *, num_heads, head_size, block_batch=None):
    """x: (B, T, D) float32.  prepared: dict from prepare_block_params().

    jit-friendly: no host syncs, no per-call weight fusion/casts (pass the
    output of prepare_block_params, computed once at init)."""
    B, T, D = x.shape
    NHH = num_heads * head_size
    D4 = 4 * D

    if "w_qkv" not in prepared:
        # Fallback for raw params; prefer calling prepare_block_params() once
        # at init so the concat/cast is not re-issued every forward.
        prepared = prepare_block_params(prepared)

    weights = (
        prepared["ln1_g"], prepared["ln1_b"],
        prepared["w_qkv"], prepared["b_qkv"],
        prepared["wp"], prepared["bp"],
        prepared["ln2_g"], prepared["ln2_b"],
        prepared["w1"], prepared["b1"],
        prepared["w2"], prepared["b2"],
    )

    bb = _pick_block_batch(B, T) if block_batch is None else block_batch
    assert B % bb == 0, "block_batch must divide batch"

    single_buffer_weights = _buffered_weights_supported()

    # --- VMEM budget: real operand sizes, capped at 75% of physical VMEM ---
    wbytes = sum(int(a.size) * a.dtype.itemsize for a in weights)
    w_buf = 1 if single_buffer_weights else 2
    io_bytes = 2 * 2 * (bb * T * D * 4)                      # x + out, double-buffered
    act_bytes = bb * T * (3 * NHH + NHH + 2 * D4 + 6 * D) * 4
    scratch_bytes = bb * T * NHH * 2
    est = w_buf * wbytes + io_bytes + 2 * act_bytes + scratch_bytes
    vmem_cap = _vmem_capacity_bytes()                         # 128 MiB v5e/v6e, 64 MiB v7x
    vmem_limit = int(min(max(2 * est, 32 * 1024 * 1024), int(0.75 * vmem_cap)))

    # --- cost estimate: lets XLA schedule around the long fused custom call ---
    flops = (2 * B * T * D * 3 * NHH                          # fused QKV projection
             + 2 * B * num_heads * T * T * head_size * 2      # QK^T and PV
             + 2 * B * T * NHH * D                            # output projection
             + 2 * B * T * D * D4 * 2)                        # FFN (both layers)
    transcendentals = B * num_heads * T * T                   # softmax exp
    bytes_accessed = 2 * B * T * D * 4 + wbytes               # x + out + weights
    cost = pl.CostEstimate(flops=flops, transcendentals=transcendentals,
                           bytes_accessed=bytes_accessed)

    wmode = pl.Buffered(1) if single_buffer_weights else None

    def _const_spec(shape):
        zero = tuple(0 for _ in shape)
        if wmode is None:
            return pl.BlockSpec(shape, lambda b: zero)
        return pl.BlockSpec(shape, lambda b: zero, pipeline_mode=wmode)

    kernel = functools.partial(_block_kernel,
                               num_heads=num_heads, head_size=head_size)
    in_specs = [pl.BlockSpec((bb, T, D), lambda b: (b, 0, 0))] + [
        _const_spec(tuple(a.shape)) for a in weights
    ]

    call = pl.pallas_call(
        kernel,
        out_shape=jax.ShapeDtypeStruct((B, T, D), x.dtype),
        grid_spec=pltpu.PrefetchScalarGridSpec(
            num_scalar_prefetch=0,
            grid=(B // bb,),
            in_specs=in_specs,
            out_specs=pl.BlockSpec((bb, T, D), lambda b: (b, 0, 0)),
            scratch_shapes=[pltpu.VMEM((bb, T, NHH), jnp.bfloat16)],
        ),
        compiler_params=pltpu.CompilerParams(
            dimension_semantics=("parallel",),
            vmem_limit_bytes=vmem_limit,
        ),
        cost_estimate=cost,
    )
    return call(x, *weights)


# -----------------------------------------------------------------------------
# Parameters & pure-JAX reference
# -----------------------------------------------------------------------------
def init_params(key, d_emb, num_heads, head_size):
    NHH = num_heads * head_size
    D4 = 4 * d_emb
    keys = jax.random.split(key, 12)

    def w(k, shape, fan_in):
        return (jax.random.normal(k, shape, jnp.float32)
                / jnp.sqrt(fan_in)).astype(jnp.float32)

    return {
        "ln1_g": jnp.ones((1, d_emb), jnp.float32),
        "ln1_b": jnp.zeros((1, d_emb), jnp.float32),
        "wq": w(keys[0], (d_emb, NHH), d_emb), "bq": w(keys[1], (1, NHH), d_emb),
        "wk": w(keys[2], (d_emb, NHH), d_emb), "bk": w(keys[3], (1, NHH), d_emb),
        "wv": w(keys[4], (d_emb, NHH), d_emb), "bv": w(keys[5], (1, NHH), d_emb),
        "wp": w(keys[6], (NHH, d_emb), NHH),   "bp": w(keys[7], (1, d_emb), NHH),
        "ln2_g": jnp.ones((1, d_emb), jnp.float32),
        "ln2_b": jnp.zeros((1, d_emb), jnp.float32),
        "w1": w(keys[8], (d_emb, D4), d_emb),  "b1": w(keys[9], (1, D4), d_emb),
        "w2": w(keys[10], (D4, d_emb), D4),    "b2": w(keys[11], (1, d_emb), D4),
    }


def reference_block(x, p, *, num_heads, head_size):
    """Pure-JAX f32 reference matching the PyTorch Block forward (eval mode)."""
    def ln(v, g, b):
        mu = jnp.mean(v, axis=-1, keepdims=True)
        var = jnp.mean((v - mu) ** 2, axis=-1, keepdims=True)
        return (v - mu) / jnp.sqrt(var + 1e-5) * g + b

    xn = ln(x, p["ln1_g"], p["ln1_b"])
    q = xn @ p["wq"] + p["bq"]
    k = xn @ p["wk"] + p["bk"]
    v = xn @ p["wv"] + p["bv"]
    outs = []
    for h in range(num_heads):
        sl = slice(h * head_size, (h + 1) * head_size)
        qh, kh, vh = q[..., sl], k[..., sl], v[..., sl]
        wei = jnp.einsum("btd,bsd->bts", qh, kh) / (head_size ** 0.5)
        wei = jax.nn.softmax(wei, axis=-1)
        outs.append(jnp.einsum("bts,bsd->btd", wei, vh))
    sa = jnp.concatenate(outs, axis=-1) @ p["wp"] + p["bp"]
    x1 = x + sa
    x1n = ln(x1, p["ln2_g"], p["ln2_b"])
    h1 = x1n @ p["w1"] + p["b1"]
    h1 = jnp.where(h1 > 0, h1, 0.01 * h1)
    return x1 + (h1 @ p["w2"] + p["b2"])


if __name__ == "__main__":
    B, T, D = 2, 8, 32          # batch, seq (num patches), d_emb
    NUM_HEADS, HEAD_SIZE = 4, 16

    key = jax.random.PRNGKey(0)
    kx, kp = jax.random.split(key)
    x = jax.random.normal(kx, (B, T, D), jnp.float32)
    params = init_params(kp, D, NUM_HEADS, HEAD_SIZE)

    # warm the build-time capability probe outside any trace, then prep weights
    # once (fuse + bf16 cast) and jit the forward.
    _buffered_weights_supported()
    prepared = prepare_block_params(params)
    fwd = jax.jit(functools.partial(vit_block,
                                    num_heads=NUM_HEADS, head_size=HEAD_SIZE))

    out = jax.block_until_ready(fwd(x, prepared))

    ref = reference_block(x, params, num_heads=NUM_HEADS, head_size=HEAD_SIZE)
    assert out.shape == (B, T, D)
    # bf16 MXU inputs + approx softmax reciprocal -> loosened tolerance vs f32 ref
    assert jnp.allclose(out, ref, atol=1e-1, rtol=1e-1), (
        "mismatch vs reference: max abs err "
        f"{float(jnp.max(jnp.abs(out - ref)))}")
    print("KERNEL_OK")
</pallas_src>

<mosaic_0001>
module attributes {stable_mosaic.version = 11 : i64} {
  func.func @_block_kernel(%arg0: i32, %arg1: memref<1x8x32xf32, #tpu.memory_space<vmem>>, %arg2: memref<1x32xf32, #tpu.memory_space<vmem>>, %arg3: memref<1x32xf32, #tpu.memory_space<vmem>>, %arg4: memref<32x192xbf16, #tpu.memory_space<vmem>>, %arg5: memref<1x192xf32, #tpu.memory_space<vmem>>, %arg6: memref<64x32xbf16, #tpu.memory_space<vmem>>, %arg7: memref<1x32xf32, #tpu.memory_space<vmem>>, %arg8: memref<1x32xf32, #tpu.memory_space<vmem>>, %arg9: memref<1x32xf32, #tpu.memory_space<vmem>>, %arg10: memref<32x128xbf16, #tpu.memory_space<vmem>>, %arg11: memref<1x128xf32, #tpu.memory_space<vmem>>, %arg12: memref<128x32xbf16, #tpu.memory_space<vmem>>, %arg13: memref<1x32xf32, #tpu.memory_space<vmem>>, %arg14: memref<1x8x32xf32, #tpu.memory_space<vmem>>, %arg15: memref<1x8x64xbf16, #tpu.memory_space<vmem>>) attributes {dimension_semantics = [#tpu.dimension_semantics<parallel>], iteration_bounds = array<i64: 2>, scalar_prefetch = 0 : i64, scratch_operands = 1 : i64, tpu.core_type = #tpu.core_type<tc>, window_params = [{transform_indices = @transform_0, window_bounds = array<i64: 1, 8, 32>}, {pipeline_mode = #tpu.pipeline_mode<synchronous>, transform_indices = @transform_1, window_bounds = array<i64: 1, 32>}, {pipeline_mode = #tpu.pipeline_mode<synchronous>, transform_indices = @transform_2, window_bounds = array<i64: 1, 32>}, {pipeline_mode = #tpu.pipeline_mode<synchronous>, transform_indices = @transform_3, window_bounds = array<i64: 32, 192>}, {pipeline_mode = #tpu.pipeline_mode<synchronous>, transform_indices = @transform_4, window_bounds = array<i64: 1, 192>}, {pipeline_mode = #tpu.pipeline_mode<synchronous>, transform_indices = @transform_5, window_bounds = array<i64: 64, 32>}, {pipeline_mode = #tpu.pipeline_mode<synchronous>, transform_indices = @transform_6, window_bounds = array<i64: 1, 32>}, {pipeline_mode = #tpu.pipeline_mode<synchronous>, transform_indices = @transform_7, window_bounds = array<i64: 1, 32>}, {pipeline_mode = #tpu.pipeline_mode<synchronous>, transform_indices = @transform_8, window_bounds = array<i64: 1, 32>}, {pipeline_mode = #tpu.pipeline_mode<synchronous>, transform_indices = @transform_9, window_bounds = array<i64: 32, 128>}, {pipeline_mode = #tpu.pipeline_mode<synchronous>, transform_indices = @transform_10, window_bounds = array<i64: 1, 128>}, {pipeline_mode = #tpu.pipeline_mode<synchronous>, transform_indices = @transform_11, window_bounds = array<i64: 128, 32>}, {pipeline_mode = #tpu.pipeline_mode<synchronous>, transform_indices = @transform_12, window_bounds = array<i64: 1, 32>}, {transform_indices = @transform_13, window_bounds = array<i64: 1, 8, 32>}]} {
    %c0 = arith.constant 0 : index
    %c0_0 = arith.constant 0 : index
    %c0_1 = arith.constant 0 : index
    %0 = vector.load %arg1[%c0, %c0_0, %c0_1] : memref<1x8x32xf32, #tpu.memory_space<vmem>>, vector<1x8x32xf32>
    %1 = vector.shape_cast %0 : vector<1x8x32xf32> to vector<8x32xf32>
    %c0_2 = arith.constant 0 : index
    %c0_3 = arith.constant 0 : index
    %2 = vector.load %arg2[%c0_2, %c0_3] : memref<1x32xf32, #tpu.memory_space<vmem>>, vector<1x32xf32>
    %c0_4 = arith.constant 0 : index
    %c0_5 = arith.constant 0 : index
    %3 = vector.load %arg3[%c0_4, %c0_5] : memref<1x32xf32, #tpu.memory_space<vmem>>, vector<1x32xf32>
    %cst = arith.constant dense<0.000000e+00> : vector<8xf32>
    %4 = vector.multi_reduction <add>, %1, %cst [1] : vector<8x32xf32> to vector<8xf32>
    %5 = vector.shape_cast %4 : vector<8xf32> to vector<8x1xf32>
    %cst_6 = arith.constant 3.200000e+01 : f32
    %6 = vector.broadcast %cst_6 : f32 to vector<8x1xf32>
    %7 = arith.divf %5, %6 : vector<8x1xf32>
    %8 = vector.broadcast %7 : vector<8x1xf32> to vector<8x32xf32>
    %9 = arith.subf %1, %8 : vector<8x32xf32>
    %10 = arith.mulf %9, %9 : vector<8x32xf32>
    %cst_7 = arith.constant dense<0.000000e+00> : vector<8xf32>
    %11 = vector.multi_reduction <add>, %10, %cst_7 [1] : vector<8x32xf32> to vector<8xf32>
    %12 = vector.shape_cast %11 : vector<8xf32> to vector<8x1xf32>
    %cst_8 = arith.constant 3.200000e+01 : f32
    %13 = vector.broadcast %cst_8 : f32 to vector<8x1xf32>
    %14 = arith.divf %12, %13 : vector<8x1xf32>
    %15 = vector.broadcast %7 : vector<8x1xf32> to vector<8x32xf32>
    %16 = arith.subf %1, %15 : vector<8x32xf32>
    %cst_9 = arith.constant 9.99999974E-6 : f32
    %17 = vector.broadcast %cst_9 : f32 to vector<8x1xf32>
    %18 = arith.addf %14, %17 : vector<8x1xf32>
    %19 = math.rsqrt %18 : vector<8x1xf32>
    %20 = vector.broadcast %19 : vector<8x1xf32> to vector<8x32xf32>
    %21 = arith.mulf %16, %20 : vector<8x32xf32>
    %22 = vector.broadcast %2 : vector<1x32xf32> to vector<8x32xf32>
    %23 = arith.mulf %21, %22 : vector<8x32xf32>
    %24 = vector.broadcast %3 : vector<1x32xf32> to vector<8x32xf32>
    %25 = arith.addf %23, %24 : vector<8x32xf32>
    %26 = arith.truncf %25 : vector<8x32xf32> to vector<8x32xbf16>
    %c0_10 = arith.constant 0 : index
    %c0_11 = arith.constant 0 : index
    %27 = vector.load %arg4[%c0_10, %c0_11] : memref<32x192xbf16, #tpu.memory_space<vmem>>, vector<32x192xbf16>
    %cst_12 = arith.constant dense<0.000000e+00> : vector<8x192xf32>
    %28 = tpu.matmul %26, %27, %cst_12 {dimension_numbers = #tpu.dot_dimension_numbers<[1], [0], [0], [1], [0, 0, 1, 1], [], []>} : vector<8x32xbf16>, vector<32x192xbf16>, vector<8x192xf32> -> vector<8x192xf32>
    %c0_13 = arith.constant 0 : index
    %c0_14 = arith.constant 0 : index
    %29 = vector.load %arg5[%c0_13, %c0_14] : memref<1x192xf32, #tpu.memory_space<vmem>>, vector<1x192xf32>
    %30 = vector.broadcast %29 : vector<1x192xf32> to vector<8x192xf32>
    %31 = arith.addf %28, %30 : vector<8x192xf32>
    %32 = vector.shape_cast %31 : vector<8x192xf32> to vector<1x8x192xf32>
    %33 = vector.extract_strided_slice %32 {offsets = [0, 0, 0], sizes = [1, 8, 16], strides = [1, 1, 1]} : vector<1x8x192xf32> to vector<1x8x16xf32>
    %34 = arith.truncf %33 : vector<1x8x16xf32> to vector<1x8x16xbf16>
    %35 = vector.extract_strided_slice %32 {offsets = [0, 0, 64], sizes = [1, 8, 16], strides = [1, 1, 1]} : vector<1x8x192xf32> to vector<1x8x16xf32>
    %36 = arith.truncf %35 : vector<1x8x16xf32> to vector<1x8x16xbf16>
    %37 = vector.extract_strided_slice %32 {offsets = [0, 0, 128], sizes = [1, 8, 16], strides = [1, 1, 1]} : vector<1x8x192xf32> to vector<1x8x16xf32>
    %38 = arith.truncf %37 : vector<1x8x16xf32> to vector<1x8x16xbf16>
    "tpu.trace_start"() <{level = 10 : i32, message = "btd,bsd->bts"}> : () -> ()
    %cst_15 = arith.constant dense<0.000000e+00> : vector<1x8x8xf32>
    %39 = tpu.matmul %34, %36, %cst_15 {dimension_numbers = #tpu.dot_dimension_numbers<[2], [2], [1], [1], [0, 0, 0, 1, 1, 1], [0], [0]>} : vector<1x8x16xbf16>, vector<1x8x16xbf16>, vector<1x8x8xf32> -> vector<1x8x8xf32>
    "tpu.trace_stop"() : () -> ()
    %cst_16 = arith.constant 2.500000e-01 : f32
    %40 = vector.broadcast %cst_16 : f32 to vector<1x8x8xf32>
    %41 = arith.mulf %39, %40 : vector<1x8x8xf32>
    %cst_17 = arith.constant dense<0xFF800000> : vector<1x8xf32>
    %42 = vector.multi_reduction <maximumf>, %41, %cst_17 [2] : vector<1x8x8xf32> to vector<1x8xf32>
    %43 = vector.shape_cast %42 : vector<1x8xf32> to vector<1x8x1xf32>
    %44 = vector.broadcast %43 : vector<1x8x1xf32> to vector<1x8x8xf32>
    %45 = arith.subf %41, %44 : vector<1x8x8xf32>
    %46 = math.exp %45 : vector<1x8x8xf32>
    %cst_18 = arith.constant dense<0.000000e+00> : vector<1x8xf32>
    %47 = vector.multi_reduction <add>, %46, %cst_18 [2] : vector<1x8x8xf32> to vector<1x8xf32>
    %48 = vector.shape_cast %47 : vector<1x8xf32> to vector<1x8x1xf32>
    %49 = tpu.reciprocal %48 {approx = true} : vector<1x8x1xf32> -> vector<1x8x1xf32>
    %50 = vector.broadcast %49 : vector<1x8x1xf32> to vector<1x8x8xf32>
    %51 = arith.mulf %46, %50 : vector<1x8x8xf32>
    %52 = arith.truncf %51 : vector<1x8x8xf32> to vector<1x8x8xbf16>
    "tpu.trace_start"() <{level = 10 : i32, message = "bts,bsd->btd"}> : () -> ()
    %cst_19 = arith.constant dense<0.000000e+00> : vector<1x8x16xf32>
    %53 = tpu.matmul %52, %38, %cst_19 {dimension_numbers = #tpu.dot_dimension_numbers<[2], [1], [1], [2], [0, 0, 0, 1, 1, 2], [0], [0]>} : vector<1x8x8xbf16>, vector<1x8x16xbf16>, vector<1x8x16xf32> -> vector<1x8x16xf32>
    "tpu.trace_stop"() : () -> ()
    %54 = arith.truncf %53 : vector<1x8x16xf32> to vector<1x8x16xbf16>
    %c0_20 = arith.constant 0 : index
    %c0_21 = arith.constant 0 : index
    %c0_22 = arith.constant 0 : index
    %55 = vector.load %arg15[%c0_20, %c0_21, %c0_22] : memref<1x8x64xbf16, #tpu.memory_space<vmem>>, vector<1x8x16xbf16>
    tpu.vector_store %arg15[%c0_20, %c0_21, %c0_22], %54 {strides = array<i32>} : memref<1x8x64xbf16, #tpu.memory_space<vmem>>, vector<1x8x16xbf16>,
    %56 = vector.extract_strided_slice %32 {offsets = [0, 0, 16], sizes = [1, 8, 16], strides = [1, 1, 1]} : vector<1x8x192xf32> to vector<1x8x16xf32>
    %57 = arith.truncf %56 : vector<1x8x16xf32> to vector<1x8x16xbf16>
    %58 = vector.extract_strided_slice %32 {offsets = [0, 0, 80], sizes = [1, 8, 16], strides = [1, 1, 1]} : vector<1x8x192xf32> to vector<1x8x16xf32>
    %59 = arith.truncf %58 : vector<1x8x16xf32> to vector<1x8x16xbf16>
    %60 = vector.extract_strided_slice %32 {offsets = [0, 0, 144], sizes = [1, 8, 16], strides = [1, 1, 1]} : vector<1x8x192xf32> to vector<1x8x16xf32>
    %61 = arith.truncf %60 : vector<1x8x16xf32> to vector<1x8x16xbf16>
    "tpu.trace_start"() <{level = 10 : i32, message = "btd,bsd->bts"}> : () -> ()
    %cst_23 = arith.constant dense<0.000000e+00> : vector<1x8x8xf32>
    %62 = tpu.matmul %57, %59, %cst_23 {dimension_numbers = #tpu.dot_dimension_numbers<[2], [2], [1], [1], [0, 0, 0, 1, 1, 1], [0], [0]>} : vector<1x8x16xbf16>, vector<1x8x16xbf16>, vector<1x8x8xf32> -> vector<1x8x8xf32>
    "tpu.trace_stop"() : () -> ()
    %cst_24 = arith.constant 2.500000e-01 : f32
    %63 = vector.broadcast %cst_24 : f32 to vector<1x8x8xf32>
    %64 = arith.mulf %62, %63 : vector<1x8x8xf32>
    %cst_25 = arith.constant dense<0xFF800000> : vector<1x8xf32>
    %65 = vector.multi_reduction <maximumf>, %64, %cst_25 [2] : vector<1x8x8xf32> to vector<1x8xf32>
    %66 = vector.shape_cast %65 : vector<1x8xf32> to vector<1x8x1xf32>
    %67 = vector.broadcast %66 : vector<1x8x1xf32> to vector<1x8x8xf32>
    %68 = arith.subf %64, %67 : vector<1x8x8xf32>
    %69 = math.exp %68 : vector<1x8x8xf32>
    %cst_26 = arith.constant dense<0.000000e+00> : vector<1x8xf32>
    %70 = vector.multi_reduction <add>, %69, %cst_26 [2] : vector<1x8x8xf32> to vector<1x8xf32>
    %71 = vector.shape_cast %70 : vector<1x8xf32> to vector<1x8x1xf32>
    %72 = tpu.reciprocal %71 {approx = true} : vector<1x8x1xf32> -> vector<1x8x1xf32>
    %73 = vector.broadcast %72 : vector<1x8x1xf32> to vector<1x8x8xf32>
    %74 = arith.mulf %69, %73 : vector<1x8x8xf32>
    %75 = arith.truncf %74 : vector<1x8x8xf32> to vector<1x8x8xbf16>
    "tpu.trace_start"() <{level = 10 : i32, message = "bts,bsd->btd"}> : () -> ()
    %cst_27 = arith.constant dense<0.000000e+00> : vector<1x8x16xf32>
    %76 = tpu.matmul %75, %61, %cst_27 {dimension_numbers = #tpu.dot_dimension_numbers<[2], [1], [1], [2], [0, 0, 0, 1, 1, 2], [0], [0]>} : vector<1x8x8xbf16>, vector<1x8x16xbf16>, vector<1x8x16xf32> -> vector<1x8x16xf32>
    "tpu.trace_stop"() : () -> ()
    %77 = arith.truncf %76 : vector<1x8x16xf32> to vector<1x8x16xbf16>
    %c0_28 = arith.constant 0 : index
    %c0_29 = arith.constant 0 : index
    %c16 = arith.constant 16 : index
    %78 = vector.load %arg15[%c0_28, %c0_29, %c16] : memref<1x8x64xbf16, #tpu.memory_space<vmem>>, vector<1x8x16xbf16>
    tpu.vector_store %arg15[%c0_28, %c0_29, %c16], %77 {strides = array<i32>} : memref<1x8x64xbf16, #tpu.memory_space<vmem>>, vector<1x8x16xbf16>,
    %79 = vector.extract_strided_slice %32 {offsets = [0, 0, 32], sizes = [1, 8, 16], strides = [1, 1, 1]} : vector<1x8x192xf32> to vector<1x8x16xf32>
    %80 = arith.truncf %79 : vector<1x8x16xf32> to vector<1x8x16xbf16>
    %81 = vector.extract_strided_slice %32 {offsets = [0, 0, 96], sizes = [1, 8, 16], strides = [1, 1, 1]} : vector<1x8x192xf32> to vector<1x8x16xf32>
    %82 = arith.truncf %81 : vector<1x8x16xf32> to vector<1x8x16xbf16>
    %83 = vector.extract_strided_slice %32 {offsets = [0, 0, 160], sizes = [1, 8, 16], strides = [1, 1, 1]} : vector<1x8x192xf32> to vector<1x8x16xf32>
    %84 = arith.truncf %83 : vector<1x8x16xf32> to vector<1x8x16xbf16>
    "tpu.trace_start"() <{level = 10 : i32, message = "btd,bsd->bts"}> : () -> ()
    %cst_30 = arith.constant dense<0.000000e+00> : vector<1x8x8xf32>
    %85 = tpu.matmul %80, %82, %cst_30 {dimension_numbers = #tpu.dot_dimension_numbers<[2], [2], [1], [1], [0, 0, 0, 1, 1, 1], [0], [0]>} : vector<1x8x16xbf16>, vector<1x8x16xbf16>, vector<1x8x8xf32> -> vector<1x8x8xf32>
    "tpu.trace_stop"() : () -> ()
    %cst_31 = arith.constant 2.500000e-01 : f32
    %86 = vector.broadcast %cst_31 : f32 to vector<1x8x8xf32>
    %87 = arith.mulf %85, %86 : vector<1x8x8xf32>
    %cst_32 = arith.constant dense<0xFF800000> : vector<1x8xf32>
    %88 = vector.multi_reduction <maximumf>, %87, %cst_32 [2] : vector<1x8x8xf32> to vector<1x8xf32>
    %89 = vector.shape_cast %88 : vector<1x8xf32> to vector<1x8x1xf32>
    %90 = vector.broadcast %89 : vector<1x8x1xf32> to vector<1x8x8xf32>
    %91 = arith.subf %87, %90 : vector<1x8x8xf32>
    %92 = math.exp %91 : vector<1x8x8xf32>
    %cst_33 = arith.constant dense<0.000000e+00> : vector<1x8xf32>
    %93 = vector.multi_reduction <add>, %92, %cst_33 [2] : vector<1x8x8xf32> to vector<1x8xf32>
    %94 = vector.shape_cast %93 : vector<1x8xf32> to vector<1x8x1xf32>
    %95 = tpu.reciprocal %94 {approx = true} : vector<1x8x1xf32> -> vector<1x8x1xf32>
    %96 = vector.broadcast %95 : vector<1x8x1xf32> to vector<1x8x8xf32>
    %97 = arith.mulf %92, %96 : vector<1x8x8xf32>
    %98 = arith.truncf %97 : vector<1x8x8xf32> to vector<1x8x8xbf16>
    "tpu.trace_start"() <{level = 10 : i32, message = "bts,bsd->btd"}> : () -> ()
    %cst_34 = arith.constant dense<0.000000e+00> : vector<1x8x16xf32>
    %99 = tpu.matmul %98, %84, %cst_34 {dimension_numbers = #tpu.dot_dimension_numbers<[2], [1], [1], [2], [0, 0, 0, 1, 1, 2], [0], [0]>} : vector<1x8x8xbf16>, vector<1x8x16xbf16>, vector<1x8x16xf32> -> vector<1x8x16xf32>
    "tpu.trace_stop"() : () -> ()
    %100 = arith.truncf %99 : vector<1x8x16xf32> to vector<1x8x16xbf16>
    %c0_35 = arith.constant 0 : index
    %c0_36 = arith.constant 0 : index
    %c32 = arith.constant 32 : index
    %101 = vector.load %arg15[%c0_35, %c0_36, %c32] : memref<1x8x64xbf16, #tpu.memory_space<vmem>>, vector<1x8x16xbf16>
    tpu.vector_store %arg15[%c0_35, %c0_36, %c32], %100 {strides = array<i32>} : memref<1x8x64xbf16, #tpu.memory_space<vmem>>, vector<1x8x16xbf16>,
    %102 = vector.extract_strided_slice %32 {offsets = [0, 0, 48], sizes = [1, 8, 16], strides = [1, 1, 1]} : vector<1x8x192xf32> to vector<1x8x16xf32>
    %103 = arith.truncf %102 : vector<1x8x16xf32> to vector<1x8x16xbf16>
    %104 = vector.extract_strided_slice %32 {offsets = [0, 0, 112], sizes = [1, 8, 16], strides = [1, 1, 1]} : vector<1x8x192xf32> to vector<1x8x16xf32>
    %105 = arith.truncf %104 : vector<1x8x16xf32> to vector<1x8x16xbf16>
    %106 = vector.extract_strided_slice %32 {offsets = [0, 0, 176], sizes = [1, 8, 16], strides = [1, 1, 1]} : vector<1x8x192xf32> to vector<1x8x16xf32>
    %107 = arith.truncf %106 : vector<1x8x16xf32> to vector<1x8x16xbf16>
    "tpu.trace_start"() <{level = 10 : i32, message = "btd,bsd->bts"}> : () -> ()
    %cst_37 = arith.constant dense<0.000000e+00> : vector<1x8x8xf32>
    %108 = tpu.matmul %103, %105, %cst_37 {dimension_numbers = #tpu.dot_dimension_numbers<[2], [2], [1], [1], [0, 0, 0, 1, 1, 1], [0], [0]>} : vector<1x8x16xbf16>, vector<1x8x16xbf16>, vector<1x8x8xf32> -> vector<1x8x8xf32>
    "tpu.trace_stop"() : () -> ()
    %cst_38 = arith.constant 2.500000e-01 : f32
    %109 = vector.broadcast %cst_38 : f32 to vector<1x8x8xf32>
    %110 = arith.mulf %108, %109 : vector<1x8x8xf32>
    %cst_39 = arith.constant dense<0xFF800000> : vector<1x8xf32>
    %111 = vector.multi_reduction <maximumf>, %110, %cst_39 [2] : vector<1x8x8xf32> to vector<1x8xf32>
    %112 = vector.shape_cast %111 : vector<1x8xf32> to vector<1x8x1xf32>
    %113 = vector.broadcast %112 : vector<1x8x1xf32> to vector<1x8x8xf32>
    %114 = arith.subf %110, %113 : vector<1x8x8xf32>
    %115 = math.exp %114 : vector<1x8x8xf32>
    %cst_40 = arith.constant dense<0.000000e+00> : vector<1x8xf32>
    %116 = vector.multi_reduction <add>, %115, %cst_40 [2] : vector<1x8x8xf32> to vector<1x8xf32>
    %117 = vector.shape_cast %116 : vector<1x8xf32> to vector<1x8x1xf32>
    %118 = tpu.reciprocal %117 {approx = true} : vector<1x8x1xf32> -> vector<1x8x1xf32>
    %119 = vector.broadcast %118 : vector<1x8x1xf32> to vector<1x8x8xf32>
    %120 = arith.mulf %115, %119 : vector<1x8x8xf32>
    %121 = arith.truncf %120 : vector<1x8x8xf32> to vector<1x8x8xbf16>
    "tpu.trace_start"() <{level = 10 : i32, message = "bts,bsd->btd"}> : () -> ()
    %cst_41 = arith.constant dense<0.000000e+00> : vector<1x8x16xf32>
    %122 = tpu.matmul %121, %107, %cst_41 {dimension_numbers = #tpu.dot_dimension_numbers<[2], [1], [1], [2], [0, 0, 0, 1, 1, 2], [0], [0]>} : vector<1x8x8xbf16>, vector<1x8x16xbf16>, vector<1x8x16xf32> -> vector<1x8x16xf32>
    "tpu.trace_stop"() : () -> ()
    %123 = arith.truncf %122 : vector<1x8x16xf32> to vector<1x8x16xbf16>
    %c0_42 = arith.constant 0 : index
    %c0_43 = arith.constant 0 : index
    %c48 = arith.constant 48 : index
    %124 = vector.load %arg15[%c0_42, %c0_43, %c48] : memref<1x8x64xbf16, #tpu.memory_space<vmem>>, vector<1x8x16xbf16>
    tpu.vector_store %arg15[%c0_42, %c0_43, %c48], %123 {strides = array<i32>} : memref<1x8x64xbf16, #tpu.memory_space<vmem>>, vector<1x8x16xbf16>,
    %c0_44 = arith.constant 0 : index
    %c0_45 = arith.constant 0 : index
    %c0_46 = arith.constant 0 : index
    %125 = vector.load %arg15[%c0_44, %c0_45, %c0_46] : memref<1x8x64xbf16, #tpu.memory_space<vmem>>, vector<1x8x64xbf16>
    %126 = vector.shape_cast %125 : vector<1x8x64xbf16> to vector<8x64xbf16>
    %c0_47 = arith.constant 0 : index
    %c0_48 = arith.constant 0 : index
    %127 = vector.load %arg6[%c0_47, %c0_48] : memref<64x32xbf16, #tpu.memory_space<vmem>>, vector<64x32xbf16>
    %cst_49 = arith.constant dense<0.000000e+00> : vector<8x32xf32>
    %128 = tpu.matmul %126, %127, %cst_49 {dimension_numbers = #tpu.dot_dimension_numbers<[1], [0], [0], [1], [0, 0, 1, 1], [], []>} : vector<8x64xbf16>, vector<64x32xbf16>, vector<8x32xf32> -> vector<8x32xf32>
    %c0_50 = arith.constant 0 : index
    %c0_51 = arith.constant 0 : index
    %129 = vector.load %arg7[%c0_50, %c0_51] : memref<1x32xf32, #tpu.memory_space<vmem>>, vector<1x32xf32>
    %130 = vector.broadcast %129 : vector<1x32xf32> to vector<8x32xf32>
    %131 = arith.addf %128, %130 : vector<8x32xf32>
    %132 = arith.addf %1, %131 : vector<8x32xf32>
    %c0_52 = arith.constant 0 : index
    %c0_53 = arith.constant 0 : index
    %133 = vector.load %arg8[%c0_52, %c0_53] : memref<1x32xf32, #tpu.memory_space<vmem>>, vector<1x32xf32>
    %c0_54 = arith.constant 0 : index
    %c0_55 = arith.constant 0 : index
    %134 = vector.load %arg9[%c0_54, %c0_55] : memref<1x32xf32, #tpu.memory_space<vmem>>, vector<1x32xf32>
    %cst_56 = arith.constant dense<0.000000e+00> : vector<8xf32>
    %135 = vector.multi_reduction <add>, %132, %cst_56 [1] : vector<8x32xf32> to vector<8xf32>
    %136 = vector.shape_cast %135 : vector<8xf32> to vector<8x1xf32>
    %cst_57 = arith.constant 3.200000e+01 : f32
    %137 = vector.broadcast %cst_57 : f32 to vector<8x1xf32>
    %138 = arith.divf %136, %137 : vector<8x1xf32>
    %139 = vector.broadcast %138 : vector<8x1xf32> to vector<8x32xf32>
    %140 = arith.subf %132, %139 : vector<8x32xf32>
    %141 = arith.mulf %140, %140 : vector<8x32xf32>
    %cst_58 = arith.constant dense<0.000000e+00> : vector<8xf32>
    %142 = vector.multi_reduction <add>, %141, %cst_58 [1] : vector<8x32xf32> to vector<8xf32>
    %143 = vector.shape_cast %142 : vector<8xf32> to vector<8x1xf32>
    %cst_59 = arith.constant 3.200000e+01 : f32
    %144 = vector.broadcast %cst_59 : f32 to vector<8x1xf32>
    %145 = arith.divf %143, %144 : vector<8x1xf32>
    %146 = vector.broadcast %138 : vector<8x1xf32> to vector<8x32xf32>
    %147 = arith.subf %132, %146 : vector<8x32xf32>
    %cst_60 = arith.constant 9.99999974E-6 : f32
    %148 = vector.broadcast %cst_60 : f32 to vector<8x1xf32>
    %149 = arith.addf %145, %148 : vector<8x1xf32>
    %150 = math.rsqrt %149 : vector<8x1xf32>
    %151 = vector.broadcast %150 : vector<8x1xf32> to vector<8x32xf32>
    %152 = arith.mulf %147, %151 : vector<8x32xf32>
    %153 = vector.broadcast %133 : vector<1x32xf32> to vector<8x32xf32>
    %154 = arith.mulf %152, %153 : vector<8x32xf32>
    %155 = vector.broadcast %134 : vector<1x32xf32> to vector<8x32xf32>
    %156 = arith.addf %154, %155 : vector<8x32xf32>
    %157 = arith.truncf %156 : vector<8x32xf32> to vector<8x32xbf16>
    %c0_61 = arith.constant 0 : index
    %c0_62 = arith.constant 0 : index
    %158 = vector.load %arg10[%c0_61, %c0_62] : memref<32x128xbf16, #tpu.memory_space<vmem>>, vector<32x128xbf16>
    %cst_63 = arith.constant dense<0.000000e+00> : vector<8x128xf32>
    %159 = tpu.matmul %157, %158, %cst_63 {dimension_numbers = #tpu.dot_dimension_numbers<[1], [0], [0], [1], [0, 0, 1, 1], [], []>} : vector<8x32xbf16>, vector<32x128xbf16>, vector<8x128xf32> -> vector<8x128xf32>
    %c0_64 = arith.constant 0 : index
    %c0_65 = arith.constant 0 : index
    %160 = vector.load %arg11[%c0_64, %c0_65] : memref<1x128xf32, #tpu.memory_space<vmem>>, vector<1x128xf32>
    %161 = vector.broadcast %160 : vector<1x128xf32> to vector<8x128xf32>
    %162 = arith.addf %159, %161 : vector<8x128xf32>
    %cst_66 = arith.constant 0.000000e+00 : f32
    %163 = vector.broadcast %cst_66 : f32 to vector<8x128xf32>
    %164 = arith.cmpf ogt, %162, %163 : vector<8x128xf32>
    %cst_67 = arith.constant 0.00999999977 : f32
    %165 = vector.broadcast %cst_67 : f32 to vector<8x128xf32>
    %166 = arith.mulf %165, %162 : vector<8x128xf32>
    %167 = arith.select %164, %162, %166 : vector<8x128xi1>, vector<8x128xf32>
    %168 = arith.truncf %167 : vector<8x128xf32> to vector<8x128xbf16>
    %c0_68 = arith.constant 0 : index
    %c0_69 = arith.constant 0 : index
    %169 = vector.load %arg12[%c0_68, %c0_69] : memref<128x32xbf16, #tpu.memory_space<vmem>>, vector<128x32xbf16>
    %cst_70 = arith.constant dense<0.000000e+00> : vector<8x32xf32>
    %170 = tpu.matmul %168, %169, %cst_70 {dimension_numbers = #tpu.dot_dimension_numbers<[1], [0], [0], [1], [0, 0, 1, 1], [], []>} : vector<8x128xbf16>, vector<128x32xbf16>, vector<8x32xf32> -> vector<8x32xf32>
    %c0_71 = arith.constant 0 : index
    %c0_72 = arith.constant 0 : index
    %171 = vector.load %arg13[%c0_71, %c0_72] : memref<1x32xf32, #tpu.memory_space<vmem>>, vector<1x32xf32>
    %172 = vector.broadcast %171 : vector<1x32xf32> to vector<8x32xf32>
    %173 = arith.addf %170, %172 : vector<8x32xf32>
    %174 = arith.addf %132, %173 : vector<8x32xf32>
    %175 = vector.shape_cast %174 : vector<8x32xf32> to vector<1x8x32xf32>
    %c0_73 = arith.constant 0 : index
    %c0_74 = arith.constant 0 : index
    %c0_75 = arith.constant 0 : index
    %176 = vector.load %arg14[%c0_73, %c0_74, %c0_75] : memref<1x8x32xf32, #tpu.memory_space<vmem>>, vector<1x8x32xf32>
    tpu.vector_store %arg14[%c0_73, %c0_74, %c0_75], %175 {strides = array<i32>} : memref<1x8x32xf32, #tpu.memory_space<vmem>>, vector<1x8x32xf32>,
    return
  }
  func.func @transform_0(%arg0: i32) -> (i32, i32, i32) {
    %c0_i32 = arith.constant 0 : i32
    %c0_i32_0 = arith.constant 0 : i32
    %c0_i32_1 = arith.constant 0 : i32
    return %arg0, %c0_i32, %c0_i32_0 : i32, i32, i32
  }
  func.func @transform_1(%arg0: i32) -> (i32, i32) {
    %c0_i32 = arith.constant 0 : i32
    %c0_i32_0 = arith.constant 0 : i32
    %c0_i32_1 = arith.constant 0 : i32
    return %c0_i32, %c0_i32_0 : i32, i32
  }
  func.func @transform_2(%arg0: i32) -> (i32, i32) {
    %c0_i32 = arith.constant 0 : i32
    %c0_i32_0 = arith.constant 0 : i32
    %c0_i32_1 = arith.constant 0 : i32
    return %c0_i32, %c0_i32_0 : i32, i32
  }
  func.func @transform_3(%arg0: i32) -> (i32, i32) {
    %c0_i32 = arith.constant 0 : i32
    %c0_i32_0 = arith.constant 0 : i32
    %c0_i32_1 = arith.constant 0 : i32
    return %c0_i32, %c0_i32_0 : i32, i32
  }
  func.func @transform_4(%arg0: i32) -> (i32, i32) {
    %c0_i32 = arith.constant 0 : i32
    %c0_i32_0 = arith.constant 0 : i32
    %c0_i32_1 = arith.constant 0 : i32
    return %c0_i32, %c0_i32_0 : i32, i32
  }
  func.func @transform_5(%arg0: i32) -> (i32, i32) {
    %c0_i32 = arith.constant 0 : i32
    %c0_i32_0 = arith.constant 0 : i32
    %c0_i32_1 = arith.constant 0 : i32
    return %c0_i32, %c0_i32_0 : i32, i32
  }
  func.func @transform_6(%arg0: i32) -> (i32, i32) {
    %c0_i32 = arith.constant 0 : i32
    %c0_i32_0 = arith.constant 0 : i32
    %c0_i32_1 = arith.constant 0 : i32
    return %c0_i32, %c0_i32_0 : i32, i32
  }
  func.func @transform_7(%arg0: i32) -> (i32, i32) {
    %c0_i32 = arith.constant 0 : i32
    %c0_i32_0 = arith.constant 0 : i32
    %c0_i32_1 = arith.constant 0 : i32
    return %c0_i32, %c0_i32_0 : i32, i32
  }
  func.func @transform_8(%arg0: i32) -> (i32, i32) {
    %c0_i32 = arith.constant 0 : i32
    %c0_i32_0 = arith.constant 0 : i32
    %c0_i32_1 = arith.constant 0 : i32
    return %c0_i32, %c0_i32_0 : i32, i32
  }
  func.func @transform_9(%arg0: i32) -> (i32, i32) {
    %c0_i32 = arith.constant 0 : i32
    %c0_i32_0 = arith.constant 0 : i32
    %c0_i32_1 = arith.constant 0 : i32
    return %c0_i32, %c0_i32_0 : i32, i32
  }
  func.func @transform_10(%arg0: i32) -> (i32, i32) {
    %c0_i32 = arith.constant 0 : i32
    %c0_i32_0 = arith.constant 0 : i32
    %c0_i32_1 = arith.constant 0 : i32
    return %c0_i32, %c0_i32_0 : i32, i32
  }
  func.func @transform_11(%arg0: i32) -> (i32, i32) {
    %c0_i32 = arith.constant 0 : i32
    %c0_i32_0 = arith.constant 0 : i32
    %c0_i32_1 = arith.constant 0 : i32
    return %c0_i32, %c0_i32_0 : i32, i32
  }
  func.func @transform_12(%arg0: i32) -> (i32, i32) {
    %c0_i32 = arith.constant 0 : i32
    %c0_i32_0 = arith.constant 0 : i32
    %c0_i32_1 = arith.constant 0 : i32
    return %c0_i32, %c0_i32_0 : i32, i32
  }
  func.func @transform_13(%arg0: i32) -> (i32, i32, i32) {
    %c0_i32 = arith.constant 0 : i32
    %c0_i32_0 = arith.constant 0 : i32
    %c0_i32_1 = arith.constant 0 : i32
    return %arg0, %c0_i32, %c0_i32_0 : i32, i32, i32
  }
}

</mosaic_0001>

<llo_original>
// kernel: vit_block.1
$region0: #{vit_block.1}
  #allocation0 [shape = 'u32[]', space=smem, size = 0x4, offset = 0x4, fixed_abs, tag = 'smem constant byte address 0x4 - core index']
  #allocation1 [shape = 'u32[144,128]{1,0:T(1,128)}', space=vmem, size = 0x12000, scoped, tag = 'internal scratch']
  #allocation2 [shape = 'bf16[1,8,64]{2,1,0:T(8,128)(2,1)}', space=vmem, size = 0x800, scoped, tag = 'scratch operand']
  %s0 = inlined_call_operand.vmem [shape: f32[2,8,32], index: 0, kind: input, shape index: {}]
  %s1 = inlined_call_operand.vmem [shape: f32[1,32], index: 1, kind: input, shape index: {}]
  %s2 = inlined_call_operand.vmem [shape: f32[1,32], index: 2, kind: input, shape index: {}]
  %s3 = inlined_call_operand.vmem [shape: bf16[32,192], index: 3, kind: input, shape index: {}]
  %s4 = inlined_call_operand.vmem [shape: f32[1,192], index: 4, kind: input, shape index: {}]
  %s5 = inlined_call_operand.vmem [shape: bf16[64,32], index: 5, kind: input, shape index: {}]
  %s6 = inlined_call_operand.vmem [shape: f32[1,32], index: 6, kind: input, shape index: {}]
  %s7 = inlined_call_operand.vmem [shape: f32[1,32], index: 7, kind: input, shape index: {}]
  %s8 = inlined_call_operand.vmem [shape: f32[1,32], index: 8, kind: input, shape index: {}]
  %s9 = inlined_call_operand.vmem [shape: bf16[32,128], index: 9, kind: input, shape index: {}]
  %s10 = inlined_call_operand.vmem [shape: f32[1,128], index: 10, kind: input, shape index: {}]
  %s11 = inlined_call_operand.vmem [shape: bf16[128,32], index: 11, kind: input, shape index: {}]
  %s12 = inlined_call_operand.vmem [shape: f32[1,32], index: 12, kind: input, shape index: {}]
  %s13 = inlined_call_operand.hbm [shape: f32[2,8,32], index: 13, kind: output, shape index: {}]
  %s14 = sld [smem:[#allocation0]]
  $region85: #{vit_block.1} parent=0
    _
  %s16 = ssub.s32 1, %s14
  %s17 = scalar_select 0, %s16, %s14
  $region1: #{vit_block.1} parent=0
    #allocation3 [shape = 'u8[8192]{0}', space=vmem, size = 0x2000, scoped, tag = 'output window, operand 0']
    #allocation4 [shape = 's32[2]{0}', space=sflag, size = 0x8, scoped, tag = 'scoped memory for vit_block.1']
    %18 = vsyncpa [#allocation4], 0
    %s19 = scalar_lea.sflag [#allocation4], 1
    %20 = vsyncpa %s19, 0
    loop: start=0, step=1, limit=4
    $region2: #{vit_block.1} parent=1 // loop_pre_header
      _
    $region3: #{vit_block.1} parent=1 // loop_header
      %s22 = sphi 0, %s26
      %p23 = scmp.ge.s32.totalorder %s22, 4
      %s32 = sphi 0, %s34
      %s35 = sphi 0, %s32
      %s36 = sphi 0, %s35
      %s52 = sphi 0, %s36
      %s56 = sphi 0, %s56
      %s58 = sphi 0, %s56
      %s59 = sphi 0, %s58
      %s73 = sphi 0, %s59
      %s77 = sphi 0, %s77
      %s79 = sphi 0, %s77
      %s80 = sphi 0, %s79
      %s94 = sphi 0, %s80
      %s98 = sphi 0, %s98
      %s100 = sphi 0, %s98
      %s101 = sphi 0, %s100
      %s115 = sphi 0, %s101
      %s119 = sphi 0, %s119
      %s121 = sphi 0, %s119
      %s122 = sphi 0, %s121
      %s136 = sphi 0, %s122
      %s140 = sphi 0, %s140
      %s142 = sphi 0, %s140
      %s143 = sphi 0, %s142
      %s157 = sphi 0, %s143
      %s161 = sphi 0, %s161
      %s163 = sphi 0, %s161
      %s164 = sphi 0, %s163
      %s178 = sphi 0, %s164
      %s182 = sphi 0, %s182
      %s184 = sphi 0, %s182
      %s185 = sphi 0, %s184
      %s199 = sphi 0, %s185
      %s203 = sphi 0, %s203
      %s205 = sphi 0, %s203
      %s206 = sphi 0, %s205
      %s220 = sphi 0, %s206
      %s224 = sphi 0, %s224
      %s226 = sphi 0, %s224
      %s227 = sphi 0, %s226
      %s241 = sphi 0, %s227
      %s245 = sphi 0, %s245
      %s247 = sphi 0, %s245
      %s248 = sphi 0, %s247
      %s262 = sphi 0, %s248
      %s266 = sphi 0, %s266
      %s268 = sphi 0, %s266
      %s269 = sphi 0, %s268
      %s283 = sphi 0, %s269
      %s287 = sphi 0, %s287
      %s289 = sphi 0, %s287
      %s290 = sphi 0, %s289
      %s304 = sphi 0, %s290
      %s310 = sphi 0, %s312
      %s313 = sphi 0, %s310
      %s314 = sphi 0, %s313
      %s330 = sphi 0, %s314
    $region4: #{vit_block.1} parent=1 // loop_header_branch
      %25 = sbr.rel (%p23) target = $region8
    $region5: #{vit_block.1} parent=1 // loop_body
      %s27 = ssub.s32 %s22, 1
      %s28 = ssub.s32 %s22, 2
      %s29 = sadd.s32 %s22, 1
      %s30 = ssub.s32 %s22, %s29
      %p31 = scmp.eq.s32.totalorder %s30, 0
      %s33 = sadd.s32 %s32, 1
      %s34 = scalar_select %p31, %s32, %s33
      %p37 = pneg %p31
      %p38 = scmp.eq.s32.totalorder %s22, 1
      %p39 = por %p37, %p38
      %p40 = scmp.ne.s32.totalorder %s32, %s35
      %p41 = scmp.eq.s32.totalorder %s22, 0
      %p42 = por %p40, %p41
      %p43 = scmp.ne.s32.totalorder %s32, %s35
      %p44 = scmp.eq.s32.totalorder %s27, 1
      %p45 = por %p43, %p44
      %p46 = scmp.ne.s32.totalorder %s35, %s36
      %p47 = scmp.eq.s32.totalorder %s27, 0
      %p48 = por %p46, %p47
      %p49 = scmp.ne.s32.totalorder %s35, %s36
      %p50 = scmp.eq.s32.totalorder %s28, 1
      %p51 = por %p49, %p50
      %p53 = scmp.ne.s32.totalorder %s36, %s52
      %p54 = scmp.eq.s32.totalorder %s28, 0
      %p55 = por %p53, %p54
      %s57 = sadd.s32 %s56, 1
      %p60 = scmp.eq.s32.totalorder %s22, 1
      %p61 = scmp.ne.s32.totalorder %s56, %s58
      %p62 = scmp.eq.s32.totalorder %s22, 0
      %p63 = por %p61, %p62
      %p64 = scmp.ne.s32.totalorder %s56, %s58
      %p65 = scmp.eq.s32.totalorder %s27, 1
      %p66 = por %p64, %p65
      %p67 = scmp.ne.s32.totalorder %s58, %s59
      %p68 = scmp.eq.s32.totalorder %s27, 0
      %p69 = por %p67, %p68
      %p70 = scmp.ne.s32.totalorder %s58, %s59
      %p71 = scmp.eq.s32.totalorder %s28, 1
      %p72 = por %p70, %p71
      %p74 = scmp.ne.s32.totalorder %s59, %s73
      %p75 = scmp.eq.s32.totalorder %s28, 0
      %p76 = por %p74, %p75
      %s78 = sadd.s32 %s77, 1
      %p81 = scmp.eq.s32.totalorder %s22, 1
      %p82 = scmp.ne.s32.totalorder %s77, %s79
      %p83 = scmp.eq.s32.totalorder %s22, 0
      %p84 = por %p82, %p83
      %p85 = scmp.ne.s32.totalorder %s77, %s79
      %p86 = scmp.eq.s32.totalorder %s27, 1
      %p87 = por %p85, %p86
      %p88 = scmp.ne.s32.totalorder %s79, %s80
      %p89 = scmp.eq.s32.totalorder %s27, 0
      %p90 = por %p88, %p89
      %p91 = scmp.ne.s32.totalorder %s79, %s80
      %p92 = scmp.eq.s32.totalorder %s28, 1
      %p93 = por %p91, %p92
      %p95 = scmp.ne.s32.totalorder %s80, %s94
      %p96 = scmp.eq.s32.totalorder %s28, 0
      %p97 = por %p95, %p96
      %s99 = sadd.s32 %s98, 1
      %p102 = scmp.eq.s32.totalorder %s22, 1
      %p103 = scmp.ne.s32.totalorder %s98, %s100
      %p104 = scmp.eq.s32.totalorder %s22, 0
      %p105 = por %p103, %p104
      %p106 = scmp.ne.s32.totalorder %s98, %s100
      %p107 = scmp.eq.s32.totalorder %s27, 1
      %p108 = por %p106, %p107
      %p109 = scmp.ne.s32.totalorder %s100, %s101
      %p110 = scmp.eq.s32.totalorder %s27, 0
      %p111 = por %p109, %p110
      %p112 = scmp.ne.s32.totalorder %s100, %s101
      %p113 = scmp.eq.s32.totalorder %s28, 1
      %p114 = por %p112, %p113
      %p116 = scmp.ne.s32.totalorder %s101, %s115
      %p117 = scmp.eq.s32.totalorder %s28, 0
      %p118 = por %p116, %p117
      %s120 = sadd.s32 %s119, 1
      %p123 = scmp.eq.s32.totalorder %s22, 1
      %p124 = scmp.ne.s32.totalorder %s119, %s121
      %p125 = scmp.eq.s32.totalorder %s22, 0
      %p126 = por %p124, %p125
      %p127 = scmp.ne.s32.totalorder %s119, %s121
      %p128 = scmp.eq.s32.totalorder %s27, 1
      %p129 = por %p127, %p128
      %p130 = scmp.ne.s32.totalorder %s121, %s122
      %p131 = scmp.eq.s32.totalorder %s27, 0
      %p132 = por %p130, %p131
      %p133 = scmp.ne.s32.totalorder %s121, %s122
      %p134 = scmp.eq.s32.totalorder %s28, 1
      %p135 = por %p133, %p134
      %p137 = scmp.ne.s32.totalorder %s122, %s136
      %p138 = scmp.eq.s32.totalorder %s28, 0
      %p139 = por %p137, %p138
      %s141 = sadd.s32 %s140, 1
      %p144 = scmp.eq.s32.totalorder %s22, 1
      %p145 = scmp.ne.s32.totalorder %s140, %s142
      %p146 = scmp.eq.s32.totalorder %s22, 0
      %p147 = por %p145, %p146
      %p148 = scmp.ne.s32.totalorder %s140, %s142
      %p149 = scmp.eq.s32.totalorder %s27, 1
      %p150 = por %p148, %p149
      %p151 = scmp.ne.s32.totalorder %s142, %s143
      %p152 = scmp.eq.s32.totalorder %s27, 0
      %p153 = por %p151, %p152
      %p154 = scmp.ne.s32.totalorder %s142, %s143
      %p155 = scmp.eq.s32.totalorder %s28, 1
      %p156 = por %p154, %p155
      %p158 = scmp.ne.s32.totalorder %s143, %s157
      %p159 = scmp.eq.s32.totalorder %s28, 0
      %p160 = por %p158, %p159
      %s162 = sadd.s32 %s161, 1
      %p165 = scmp.eq.s32.totalorder %s22, 1
      %p166 = scmp.ne.s32.totalorder %s161, %s163
      %p167 = scmp.eq.s32.totalorder %s22, 0
      %p168 = por %p166, %p167
      %p169 = scmp.ne.s32.totalorder %s161, %s163
      %p170 = scmp.eq.s32.totalorder %s27, 1
      %p171 = por %p169, %p170
      %p172 = scmp.ne.s32.totalorder %s163, %s164
      %p173 = scmp.eq.s32.totalorder %s27, 0
      %p174 = por %p172, %p173
      %p175 = scmp.ne.s32.totalorder %s163, %s164
      %p176 = scmp.eq.s32.totalorder %s28, 1
      %p177 = por %p175, %p176
      %p179 = scmp.ne.s32.totalorder %s164, %s178
      %p180 = scmp.eq.s32.totalorder %s28, 0
      %p181 = por %p179, %p180
      %s183 = sadd.s32 %s182, 1
      %p186 = scmp.eq.s32.totalorder %s22, 1
      %p187 = scmp.ne.s32.totalorder %s182, %s184
      %p188 = scmp.eq.s32.totalorder %s22, 0
      %p189 = por %p187, %p188
      %p190 = scmp.ne.s32.totalorder %s182, %s184
      %p191 = scmp.eq.s32.totalorder %s27, 1
      %p192 = por %p190, %p191
      %p193 = scmp.ne.s32.totalorder %s184, %s185
      %p194 = scmp.eq.s32.totalorder %s27, 0
      %p195 = por %p193, %p194
      %p196 = scmp.ne.s32.totalorder %s184, %s185
      %p197 = scmp.eq.s32.totalorder %s28, 1
      %p198 = por %p196, %p197
      %p200 = scmp.ne.s32.totalorder %s185, %s199
      %p201 = scmp.eq.s32.totalorder %s28, 0
      %p202 = por %p200, %p201
      %s204 = sadd.s32 %s203, 1
      %p207 = scmp.eq.s32.totalorder %s22, 1
      %p208 = scmp.ne.s32.totalorder %s203, %s205
      %p209 = scmp.eq.s32.totalorder %s22, 0
      %p210 = por %p208, %p209
      %p211 = scmp.ne.s32.totalorder %s203, %s205
      %p212 = scmp.eq.s32.totalorder %s27, 1
      %p213 = por %p211, %p212
      %p214 = scmp.ne.s32.totalorder %s205, %s206
      %p215 = scmp.eq.s32.totalorder %s27, 0
      %p216 = por %p214, %p215
      %p217 = scmp.ne.s32.totalorder %s205, %s206
      %p218 = scmp.eq.s32.totalorder %s28, 1
      %p219 = por %p217, %p218
      %p221 = scmp.ne.s32.totalorder %s206, %s220
      %p222 = scmp.eq.s32.totalorder %s28, 0
      %p223 = por %p221, %p222
      %s225 = sadd.s32 %s224, 1
      %p228 = scmp.eq.s32.totalorder %s22, 1
      %p229 = scmp.ne.s32.totalorder %s224, %s226
      %p230 = scmp.eq.s32.totalorder %s22, 0
      %p231 = por %p229, %p230
      %p232 = scmp.ne.s32.totalorder %s224, %s226
      %p233 = scmp.eq.s32.totalorder %s27, 1
      %p234 = por %p232, %p233
      %p235 = scmp.ne.s32.totalorder %s226, %s227
      %p236 = scmp.eq.s32.totalorder %s27, 0
      %p237 = por %p235, %p236
      %p238 = scmp.ne.s32.totalorder %s226, %s227
      %p239 = scmp.eq.s32.totalorder %s28, 1
      %p240 = por %p238, %p239
      %p242 = scmp.ne.s32.totalorder %s227, %s241
      %p243 = scmp.eq.s32.totalorder %s28, 0
      %p244 = por %p242, %p243
      %s246 = sadd.s32 %s245, 1
      %p249 = scmp.eq.s32.totalorder %s22, 1
      %p250 = scmp.ne.s32.totalorder %s245, %s247
      %p251 = scmp.eq.s32.totalorder %s22, 0
      %p252 = por %p250, %p251
      %p253 = scmp.ne.s32.totalorder %s245, %s247
      %p254 = scmp.eq.s32.totalorder %s27, 1
      %p255 = por %p253, %p254
      %p256 = scmp.ne.s32.totalorder %s247, %s248
      %p257 = scmp.eq.s32.totalorder %s27, 0
      %p258 = por %p256, %p257
      %p259 = scmp.ne.s32.totalorder %s247, %s248
      %p260 = scmp.eq.s32.totalorder %s28, 1
      %p261 = por %p259, %p260
      %p263 = scmp.ne.s32.totalorder %s248, %s262
      %p264 = scmp.eq.s32.totalorder %s28, 0
      %p265 = por %p263, %p264
      %s267 = sadd.s32 %s266, 1
      %p270 = scmp.eq.s32.totalorder %s22, 1
      %p271 = scmp.ne.s32.totalorder %s266, %s268
      %p272 = scmp.eq.s32.totalorder %s22, 0
      %p273 = por %p271, %p272
      %p274 = scmp.ne.s32.totalorder %s266, %s268
      %p275 = scmp.eq.s32.totalorder %s27, 1
      %p276 = por %p274, %p275
      %p277 = scmp.ne.s32.totalorder %s268, %s269
      %p278 = scmp.eq.s32.totalorder %s27, 0
      %p279 = por %p277, %p278
      %p280 = scmp.ne.s32.totalorder %s268, %s269
      %p281 = scmp.eq.s32.totalorder %s28, 1
      %p282 = por %p280, %p281
      %p284 = scmp.ne.s32.totalorder %s269, %s283
      %p285 = scmp.eq.s32.totalorder %s28, 0
      %p286 = por %p284, %p285
      %s288 = sadd.s32 %s287, 1
      %p291 = scmp.eq.s32.totalorder %s22, 1
      %p292 = scmp.ne.s32.totalorder %s287, %s289
      %p293 = scmp.eq.s32.totalorder %s22, 0
      %p294 = por %p292, %p293
      %p295 = scmp.ne.s32.totalorder %s287, %s289
      %p296 = scmp.eq.s32.totalorder %s27, 1
      %p297 = por %p295, %p296
      %p298 = scmp.ne.s32.totalorder %s289, %s290
      %p299 = scmp.eq.s32.totalorder %s27, 0
      %p300 = por %p298, %p299
      %p301 = scmp.ne.s32.totalorder %s289, %s290
      %p302 = scmp.eq.s32.totalorder %s28, 1
      %p303 = por %p301, %p302
      %p305 = scmp.ne.s32.totalorder %s290, %s304
      %p306 = scmp.eq.s32.totalorder %s28, 0
      %p307 = por %p305, %p306
      %s308 = ssub.s32 %s22, %s29
      %p309 = scmp.eq.s32.totalorder %s308, 0
      %s311 = sadd.s32 %s310, 1
      %s312 = scalar_select %p309, %s310, %s311
      %p315 = pneg %p309
      %p316 = scmp.eq.s32.totalorder %s22, 1
      %p317 = por %p315, %p316
      %p318 = scmp.ne.s32.totalorder %s310, %s313
      %p319 = scmp.eq.s32.totalorder %s22, 0
      %p320 = por %p318, %p319
      %p321 = scmp.ne.s32.totalorder %s310, %s313
      %p322 = scmp.eq.s32.totalorder %s27, 1
      %p323 = por %p321, %p322
      %p324 = scmp.ne.s32.totalorder %s313, %s314
      %p325 = scmp.eq.s32.totalorder %s27, 0
      %p326 = por %p324, %p325
      %p327 = scmp.ne.s32.totalorder %s313, %s314
      %p328 = scmp.eq.s32.totalorder %s28, 1
      %p329 = por %p327, %p328
      %p331 = scmp.ne.s32.totalorder %s314, %s330
      %p332 = scmp.eq.s32.totalorder %s28, 0
      %p333 = por %p331, %p332
      %p334 = scmp.le.s32.totalorder 1, %s22
      %p335 = scmp.lt.s32.totalorder %s22, 3
      %p336 = pnand %p334, %p335
      %p337 = pneg %p336
      // Predicated region
      $region9: #{vit_block.1} parent=5 // pred_check
        _
      $region10: #{vit_block.1} parent=5 // pred_check_branch
        %339 = sbr.rel (%p336) target = $region12
      $region11: #{vit_block.1} parent=5 // pred_region
        %s340 = ssub.s32 %s22, 1
        // Predicated region
        $region13: #{vit_block.1} parent=11 // pred_check
          %p341 = pneg %p69
        $region14: #{vit_block.1} parent=11 // pred_check_branch
          %343 = sbr.rel (%p341) target = $region16
        $region15: #{vit_block.1} parent=11 // pred_region
          _
        $region16: #{vit_block.1} parent=11 // pred_fallthru
          _
        // Predicated region
        $region17: #{vit_block.1} parent=11 // pred_check
          %p344 = pneg %p90
        $region18: #{vit_block.1} parent=11 // pred_check_branch
          %346 = sbr.rel (%p344) target = $region20
        $region19: #{vit_block.1} parent=11 // pred_region
          _
        $region20: #{vit_block.1} parent=11 // pred_fallthru
          _
        // Predicated region
        $region21: #{vit_block.1} parent=11 // pred_check
          %p347 = pneg %p111
        $region22: #{vit_block.1} parent=11 // pred_check_branch
          %349 = sbr.rel (%p347) target = $region24
        $region23: #{vit_block.1} parent=11 // pred_region
          _
        $region24: #{vit_block.1} parent=11 // pred_fallthru
          _
        // Predicated region
        $region25: #{vit_block.1} parent=11 // pred_check
          %p350 = pneg %p132
        $region26: #{vit_block.1} parent=11 // pred_check_branch
          %352 = sbr.rel (%p350) target = $region28
        $region27: #{vit_block.1} parent=11 // pred_region
          _
        $region28: #{vit_block.1} parent=11 // pred_fallthru
          _
        // Predicated region
        $region29: #{vit_block.1} parent=11 // pred_check
          %p353 = pneg %p153
        $region30: #{vit_block.1} parent=11 // pred_check_branch
          %355 = sbr.rel (%p353) target = $region32
        $region31: #{vit_block.1} parent=11 // pred_region
          _
        $region32: #{vit_block.1} parent=11 // pred_fallthru
          _
        // Predicated region
        $region33: #{vit_block.1} parent=11 // pred_check
          %p356 = pneg %p174
        $region34: #{vit_block.1} parent=11 // pred_check_branch
          %358 = sbr.rel (%p356) target = $region36
        $region35: #{vit_block.1} parent=11 // pred_region
          _
        $region36: #{vit_block.1} parent=11 // pred_fallthru
          _
        // Predicated region
        $region37: #{vit_block.1} parent=11 // pred_check
          %p359 = pneg %p195
        $region38: #{vit_block.1} parent=11 // pred_check_branch
          %361 = sbr.rel (%p359) target = $region40
        $region39: #{vit_block.1} parent=11 // pred_region
          _
        $region40: #{vit_block.1} parent=11 // pred_fallthru
          _
        // Predicated region
        $region41: #{vit_block.1} parent=11 // pred_check
          %p362 = pneg %p216
        $region42: #{vit_block.1} parent=11 // pred_check_branch
          %364 = sbr.rel (%p362) target = $region44
        $region43: #{vit_block.1} parent=11 // pred_region
          _
        $region44: #{vit_block.1} parent=11 // pred_fallthru
          _
        // Predicated region
        $region45: #{vit_block.1} parent=11 // pred_check
          %p365 = pneg %p237
        $region46: #{vit_block.1} parent=11 // pred_check_branch
          %367 = sbr.rel (%p365) target = $region48
        $region47: #{vit_block.1} parent=11 // pred_region
          _
        $region48: #{vit_block.1} parent=11 // pred_fallthru
          _
        // Predicated region
        $region49: #{vit_block.1} parent=11 // pred_check
          %p368 = pneg %p258
        $region50: #{vit_block.1} parent=11 // pred_check_branch
          %370 = sbr.rel (%p368) target = $region52
        $region51: #{vit_block.1} parent=11 // pred_region
          _
        $region52: #{vit_block.1} parent=11 // pred_fallthru
          _
        // Predicated region
        $region53: #{vit_block.1} parent=11 // pred_check
          %p371 = pneg %p279
        $region54: #{vit_block.1} parent=11 // pred_check_branch
          %373 = sbr.rel (%p371) target = $region56
        $region55: #{vit_block.1} parent=11 // pred_region
          _
        $region56: #{vit_block.1} parent=11 // pred_fallthru
          _
        // Predicated region
        $region57: #{vit_block.1} parent=11 // pred_check
          %p374 = pneg %p300
        $region58: #{vit_block.1} parent=11 // pred_check_branch
          %376 = sbr.rel (%p374) target = $region60
        $region59: #{vit_block.1} parent=11 // pred_region
          _
        $region60: #{vit_block.1} parent=11 // pred_fallthru
          _
      $region12: #{vit_block.1} parent=5 // pred_fallthru
        _
      %p377 = scmp.lt.s32.totalorder %s22, 2
      // Predicated region
      $region61: #{vit_block.1} parent=5 // pred_check
        %p378 = pneg %p377
      $region62: #{vit_block.1} parent=5 // pred_check_branch
        %380 = sbr.rel (%p378) target = $region64
      $region63: #{vit_block.1} parent=5 // pred_region
        // Predicated region
        $region65: #{vit_block.1} parent=63 // pred_check
          %p381 = pneg %p42
        $region66: #{vit_block.1} parent=63 // pred_check_branch
          %383 = sbr.rel (%p381) target = $region68
        $region67: #{vit_block.1} parent=63 // pred_region
          %p384 = scmp.lt.s32.totalorder %s22, 1
          %s385 = scalar_select %p384, %s22, 1
          %s386 = smul.addr %s385, 8
          %s387 = scalar_lea.vmem %s0, %s386
        $region68: #{vit_block.1} parent=63 // pred_fallthru
          _
      $region64: #{vit_block.1} parent=5 // pred_fallthru
        _
      %p388 = scmp.le.s32.totalorder 1, %s22
      %p389 = scmp.lt.s32.totalorder %s22, 3
      %p390 = pnand %p388, %p389
      %p391 = pneg %p390
      // Predicated region
      $region69: #{vit_block.1} parent=5 // pred_check
        _
      $region70: #{vit_block.1} parent=5 // pred_check_branch
        %393 = sbr.rel (%p390) target = $region72
      $region71: #{vit_block.1} parent=5 // pred_region
        %s394 = ssub.s32 %s22, 1
        %p395 = scmp.lt.s32.totalorder %s27, 1
        %s396 = scalar_select %p395, %s27, 1
        %s397 = smul.addr %s396, 8
        %s398 = scalar_lea.vmem %s0, %s397
        %p399 = pneg %p48
        %p400 = pneg %p45
        %p401 = pneg %p69
        %p402 = pneg %p66
        %p403 = pneg %p90
        %p404 = pneg %p87
        %p405 = pneg %p111
        %p406 = pneg %p108
        %p407 = pneg %p132
        %p408 = pneg %p129
        %p409 = pneg %p153
        %p410 = pneg %p150
        %p411 = pneg %p174
        %p412 = pneg %p171
        %p413 = pneg %p195
        %p414 = pneg %p192
        %p415 = pneg %p216
        %p416 = pneg %p213
        %p417 = pneg %p237
        %p418 = pneg %p234
        %p419 = pneg %p258
        %p420 = pneg %p255
        %p421 = pneg %p279
        %p422 = pneg %p276
        %p423 = pneg %p300
        %p424 = pneg %p297
        %p425 = pneg %p326
        %p426 = pneg %p323
        %s427 = sand.u32 %s313, 1
        %s428 = scalar_lea.sflag [#allocation4], %s427
        %s429 = sand.u32 %s313, 1
        %s430 = smul.addr %s429, 8
        %s431 = scalar_lea.vmem [#allocation3], %s430
        %p432 = scmp.lt.s32.totalorder %s27, 1
        %s433 = scalar_select %p432, %s27, 1
        %s434 = smul.addr %s433, 8
        %s435 = scalar_lea.vmem %s0, %s434
        %v437 = vld [vmem:[%s435] sm:$0xff]
        %v438 = vld [vmem:[%s1] sm:$0x1]
        %v439 = vld [vmem:[%s2] sm:$0x1]
        %vm440 = vcmask 261120
        %v441 = vsel %vm440, %v437, 0.0
        %442 = vadd.xlane.f32.xlu0 %v441
        %v443 = vpop.xlane.xlu0 %442
        %v444 = vrcp.pop 32.0
        %v445 = vmul.f32 %v443, %v444
        %v446 = vsub.f32 %v437, %v445
        %v447 = vmul.f32 %v446, %v446
        %v448 = vsel %vm440, %v447, 0.0
        %449 = vadd.xlane.f32.xlu0 %v448
        %v450 = vpop.xlane.xlu0 %449
        %v451 = vmul.f32 %v450, %v444
        %v452 = vadd.f32 %v451, 1e-05
        %v453 = vrsqrt.pop %v452
        %v454 = vmul.f32 %v446, %v453
        %v456 = vlaneseq
        %v457 = vshrl.u32 %v456, 7
        %v458 = vsub.s32 0, %v457
        %v459 = vrot.slane %v438, %v458
        %v461 = vmul.f32 %v454, %v459
        %v463 = vlaneseq
        %v464 = vshrl.u32 %v463, 7
        %v465 = vsub.s32 0, %v464
        %v466 = vrot.slane %v439, %v465
        %v468 = vadd.f32 %v461, %v466
        %v469 = vpack.c.bf16 %v468, %v468
        %v470 = vld [vmem:[%s3] sm:$0xff]
        %v471 = vld [vmem:[%s3 + $0x8] sm:$0xff]
        %v472 = vld [vmem:[%s3 + $0x10] sm:$0xff]
        %v473 = vld [vmem:[%s3 + $0x18] sm:$0xff]
        %v474 = vld [vmem:[%s4] sm:$0x3]
        %v476 = vlaneseq
        %v477 = vshrl.u32 %v476, 7
        %v478 = vsub.s32 0, %v477
        %v479 = vrot.slane %v474, %v478
        %v480 = vlaneseq
        %v481 = vshrl.u32 %v480, 7
        %v482 = vsub.s32 1, %v481
        %v483 = vrot.slane %v474, %v482
        %v490 = vunpack.c.l.b16 %v470
        %v491 = vunpack.c.h.b16 %v470
        %v492 = vunpack.c.l.b16 %v471
        %v493 = vunpack.c.h.b16 %v471
        %v494 = vunpack.c.l.b16 %v472
        %v495 = vunpack.c.h.b16 %v472
        %v496 = vunpack.c.l.b16 %v473
        %v497 = vunpack.c.h.b16 %v473
        %v498 = vpack.c.b16 %v492, %v490
        %v499 = vpack.c.b16 %v493, %v491
        %v500 = vpack.c.b16 %v496, %v494
        %v501 = vpack.c.b16 %v497, %v495
        %v507 = vsel %vm440, %v469, 0
        %509 = vmatprep.subr.bf16.mxu0 0
        %510 = vmatpush1.bf16.msra.mxu0 0
        %511 = vmatprep.subr.bf16.mxu0 0
        %512 = vmatpush1.bf16.msra.mxu0 0
        %513 = vmatprep.subr.bf16.mxu0 0
        %514 = vmatpush1.bf16.msra.mxu0 0
        %515 = vmatprep.subr.bf16.mxu0 0
        %516 = vmatpush1.bf16.msra.mxu0 0
        %517 = vmatprep.subr.bf16.mxu0 0
        %518 = vmatpush1.bf16.msra.mxu0 0
        %519 = vmatprep.subr.bf16.mxu0 0
        %520 = vmatpush1.bf16.msra.mxu0 0
        %521 = vmatprep.subr.bf16.mxu0 %v501
        %522 = vmatpush1.bf16.msra.mxu0 %v500
        %523 = vmatprep.subr.bf16.mxu0 %v499
        %524 = vmatpush1.bf16.msra.mxu0 %v498
        %525 = vmatprep.subr.bf16.mxu0 0
        %526 = vmatpush2.bf16.msra.mxu0 0
        %527 = vmatprep.subr.bf16.mxu0 0
        %528 = vmatpush2.bf16.msra.mxu0 0
        %529 = vmatprep.subr.bf16.mxu0 0
        %530 = vmatpush2.bf16.msra.mxu0 0
        %531 = vmatprep.subr.bf16.mxu0 0
        %532 = vmatpush2.bf16.msra.mxu0 0
        %533 = vmatprep.subr.bf16.mxu0 0
        %534 = vmatpush2.bf16.msra.mxu0 0
        %535 = vmatprep.subr.bf16.mxu0 0
        %536 = vmatpush2.bf16.msra.mxu0 0
        %537 = vmatprep.subr.bf16.mxu0 0
        %538 = vmatpush2.bf16.msra.mxu0 0
        %539 = vmatprep.subr.bf16.mxu0 0
        %540 = vmatpush2.bf16.msra.mxu0 0
        %541 = vmatprep.mubr.bf16.mxu0 0
        %542 = vmatmul.mubr.bf16.gmra.mxu0 %v507
        %v543 = vpop.f32.mrf.mxu0
        %v544 = vadd.f32 %v479, %v543
        %v545 = vpop.f32.mrf.mxu0
        %v546 = vadd.f32 %v483, %v545
        %v547 = vpop.f32.mrf.mxu0
        %v548 = vpop.f32.mrf.mxu0
        %549 = vdwg.mxu0
        %v550 = vpack.c.bf16 %v544, %v544
        %v551 = vpack.c.bf16 %v546, %v546
        %553 = vrot.lane.b32.xlu0 %v550, 64
        %v554 = vpop.permute.xlu0 %553
        %vm555 = vcmask 130048
        %v557 = vsel %vm555, %v550, 0
        %v560 = vsel %vm555, %v554, 0
        %562 = vmatprep.subr.bf16.mxu0 0
        %563 = vmatpush1.bf16.xpose.msra.mxu0 0
        %564 = vmatprep.subr.bf16.mxu0 0
        %565 = vmatpush1.bf16.xpose.msra.mxu0 0
        %566 = vmatprep.subr.bf16.mxu0 0
        %567 = vmatpush1.bf16.xpose.msra.mxu0 0
        %568 = vmatprep.subr.bf16.mxu0 0
        %569 = vmatpush1.bf16.xpose.msra.mxu0 0
        %570 = vmatprep.subr.bf16.mxu0 0
        %571 = vmatpush1.bf16.xpose.msra.mxu0 0
        %572 = vmatprep.subr.bf16.mxu0 0
        %573 = vmatpush1.bf16.xpose.msra.mxu0 0
        %574 = vmatprep.subr.bf16.mxu0 0
        %575 = vmatpush1.bf16.xpose.msra.mxu0 0
        %576 = vmatprep.subr.bf16.mxu0 0
        %577 = vmatpush1.bf16.xpose.msra.mxu0 %v560
        %578 = vmatprep.subr.bf16.mxu0 0
        %579 = vmatpush2.bf16.xpose.msra.mxu0 0
        %580 = vmatprep.subr.bf16.mxu0 0
        %581 = vmatpush2.bf16.xpose.msra.mxu0 0
        %582 = vmatprep.subr.bf16.mxu0 0
        %583 = vmatpush2.bf16.xpose.msra.mxu0 0
        %584 = vmatprep.subr.bf16.mxu0 0
        %585 = vmatpush2.bf16.xpose.msra.mxu0 0
        %586 = vmatprep.subr.bf16.mxu0 0
        %587 = vmatpush2.bf16.xpose.msra.mxu0 0
        %588 = vmatprep.subr.bf16.mxu0 0
        %589 = vmatpush2.bf16.xpose.msra.mxu0 0
        %590 = vmatprep.subr.bf16.mxu0 0
        %591 = vmatpush2.bf16.xpose.msra.mxu0 0
        %592 = vmatprep.subr.bf16.mxu0 0
        %593 = vmatpush2.bf16.xpose.msra.mxu0 0
        %594 = vmatprep.mubr.bf16.mxu0 0
        %595 = vmatmul.mubr.bf16.gmra.mxu0 %v557
        %v596 = vpop.f32.mrf.mxu0
        %v597 = vadd.f32 0.0, %v596
        %v598 = vpop.f32.mrf.mxu0
        %v599 = vpop.f32.mrf.mxu0
        %v600 = vpop.f32.mrf.mxu0
        %601 = vdwg.mxu0
        %v602 = vmul.f32 %v597, 0.25
        %vm603 = vcmask 64512
        %v604 = vsel %vm603, %v602, -inf
        %605 = vmax.xlane.f32.xlu0 %v604
        %v606 = vpop.xlane.xlu0 %605
        %v607 = vsub.f32 %v602, %v606
        %v608 = vmul.f32 %v607, 1.442695
        %v609 = vpow.pop %v608
        %v610 = vsel %vm603, %v609, 0.0
        %611 = vadd.xlane.f32.xlu0 %v610
        %v612 = vpop.xlane.xlu0 %611
        %v613 = vrcp.pop %v612
        %v614 = vmul.f32 %v609, %v613
        %v615 = vpack.c.bf16 %v614, %v614
        %v617 = vsel %vm603, %v615, 0
        %vm619 = vcmask 1043456
        %v621 = vsel %vm619, %v551, 0
        %623 = vmatprep.subr.bf16.mxu0 0
        %624 = vmatpush1.bf16.msra.mxu0 0
        %625 = vmatprep.subr.bf16.mxu0 0
        %626 = vmatpush1.bf16.msra.mxu0 0
        %627 = vmatprep.subr.bf16.mxu0 0
        %628 = vmatpush1.bf16.msra.mxu0 0
        %629 = vmatprep.subr.bf16.mxu0 0
        %630 = vmatpush1.bf16.msra.mxu0 0
        %631 = vmatprep.subr.bf16.mxu0 0
        %632 = vmatpush1.bf16.msra.mxu0 0
        %633 = vmatprep.subr.bf16.mxu0 0
        %634 = vmatpush1.bf16.msra.mxu0 0
        %635 = vmatprep.subr.bf16.mxu0 0
        %636 = vmatpush1.bf16.msra.mxu0 0
        %637 = vmatprep.subr.bf16.mxu0 0
        %638 = vmatpush1.bf16.msra.mxu0 %v621
        %639 = vmatprep.subr.bf16.mxu0 0
        %640 = vmatpush2.bf16.msra.mxu0 0
        %641 = vmatprep.subr.bf16.mxu0 0
        %642 = vmatpush2.bf16.msra.mxu0 0
        %643 = vmatprep.subr.bf16.mxu0 0
        %644 = vmatpush2.bf16.msra.mxu0 0
        %645 = vmatprep.subr.bf16.mxu0 0
        %646 = vmatpush2.bf16.msra.mxu0 0
        %647 = vmatprep.subr.bf16.mxu0 0
        %648 = vmatpush2.bf16.msra.mxu0 0
        %649 = vmatprep.subr.bf16.mxu0 0
        %650 = vmatpush2.bf16.msra.mxu0 0
        %651 = vmatprep.subr.bf16.mxu0 0
        %652 = vmatpush2.bf16.msra.mxu0 0
        %653 = vmatprep.subr.bf16.mxu0 0
        %654 = vmatpush2.bf16.msra.mxu0 0
        %655 = vmatprep.mubr.bf16.mxu0 0
        %656 = vmatmul.mubr.bf16.gmra.mxu0 %v617
        %v657 = vpop.f32.mrf.mxu0
        %v658 = vadd.f32 0.0, %v657
        %v659 = vpop.f32.mrf.mxu0
        %v660 = vpop.f32.mrf.mxu0
        %v661 = vpop.f32.mrf.mxu0
        %662 = vdwg.mxu0
        %v663 = vpack.c.bf16 %v658, %v658
        %vm664 = vcmask 125952
        %665 = vst.msk [vmem:[#allocation2] sm:$0xf] %vm664, %v663
        %666 = vrot.lane.b32.xlu0 %v550, 112
        %v667 = vpop.permute.xlu0 %666
        %668 = vrot.lane.b32.xlu0 %v550, 48
        %v669 = vpop.permute.xlu0 %668
        %v671 = vsel %vm555, %v667, 0
        %v674 = vsel %vm555, %v669, 0
        %676 = vmatprep.subr.bf16.mxu0 0
        %677 = vmatpush1.bf16.xpose.msra.mxu0 0
        %678 = vmatprep.subr.bf16.mxu0 0
        %679 = vmatpush1.bf16.xpose.msra.mxu0 0
        %680 = vmatprep.subr.bf16.mxu0 0
        %681 = vmatpush1.bf16.xpose.msra.mxu0 0
        %682 = vmatprep.subr.bf16.mxu0 0
        %683 = vmatpush1.bf16.xpose.msra.mxu0 0
        %684 = vmatprep.subr.bf16.mxu0 0
        %685 = vmatpush1.bf16.xpose.msra.mxu0 0
        %686 = vmatprep.subr.bf16.mxu0 0
        %687 = vmatpush1.bf16.xpose.msra.mxu0 0
        %688 = vmatprep.subr.bf16.mxu0 0
        %689 = vmatpush1.bf16.xpose.msra.mxu0 0
        %690 = vmatprep.subr.bf16.mxu0 0
        %691 = vmatpush1.bf16.xpose.msra.mxu0 %v674
        %692 = vmatprep.subr.bf16.mxu0 0
        %693 = vmatpush2.bf16.xpose.msra.mxu0 0
        %694 = vmatprep.subr.bf16.mxu0 0
        %695 = vmatpush2.bf16.xpose.msra.mxu0 0
        %696 = vmatprep.subr.bf16.mxu0 0
        %697 = vmatpush2.bf16.xpose.msra.mxu0 0
        %698 = vmatprep.subr.bf16.mxu0 0
        %699 = vmatpush2.bf16.xpose.msra.mxu0 0
        %700 = vmatprep.subr.bf16.mxu0 0
        %701 = vmatpush2.bf16.xpose.msra.mxu0 0
        %702 = vmatprep.subr.bf16.mxu0 0
        %703 = vmatpush2.bf16.xpose.msra.mxu0 0
        %704 = vmatprep.subr.bf16.mxu0 0
        %705 = vmatpush2.bf16.xpose.msra.mxu0 0
        %706 = vmatprep.subr.bf16.mxu0 0
        %707 = vmatpush2.bf16.xpose.msra.mxu0 0
        %708 = vmatprep.mubr.bf16.mxu0 0
        %709 = vmatmul.mubr.bf16.gmra.mxu0 %v671
        %v710 = vpop.f32.mrf.mxu0
        %v711 = vadd.f32 0.0, %v710
        %v712 = vpop.f32.mrf.mxu0
        %v713 = vpop.f32.mrf.mxu0
        %v714 = vpop.f32.mrf.mxu0
        %715 = vdwg.mxu0
        %v716 = vmul.f32 %v711, 0.25
        %v717 = vsel %vm603, %v716, -inf
        %718 = vmax.xlane.f32.xlu0 %v717
        %v719 = vpop.xlane.xlu0 %718
        %v720 = vsub.f32 %v716, %v719
        %v721 = vmul.f32 %v720, 1.442695
        %v722 = vpow.pop %v721
        %v723 = vsel %vm603, %v722, 0.0
        %724 = vadd.xlane.f32.xlu0 %v723
        %v725 = vpop.xlane.xlu0 %724
        %v726 = vrcp.pop %v725
        %v727 = vmul.f32 %v722, %v726
        %v728 = vpack.c.bf16 %v727, %v727
        %730 = vrot.lane.b32.xlu0 %v551, 112
        %v731 = vpop.permute.xlu0 %730
        %v733 = vsel %vm603, %v728, 0
        %v736 = vsel %vm619, %v731, 0
        %738 = vmatprep.subr.bf16.mxu0 0
        %739 = vmatpush1.bf16.msra.mxu0 0
        %740 = vmatprep.subr.bf16.mxu0 0
        %741 = vmatpush1.bf16.msra.mxu0 0
        %742 = vmatprep.subr.bf16.mxu0 0
        %743 = vmatpush1.bf16.msra.mxu0 0
        %744 = vmatprep.subr.bf16.mxu0 0
        %745 = vmatpush1.bf16.msra.mxu0 0
        %746 = vmatprep.subr.bf16.mxu0 0
        %747 = vmatpush1.bf16.msra.mxu0 0
        %748 = vmatprep.subr.bf16.mxu0 0
        %749 = vmatpush1.bf16.msra.mxu0 0
        %750 = vmatprep.subr.bf16.mxu0 0
        %751 = vmatpush1.bf16.msra.mxu0 0
        %752 = vmatprep.subr.bf16.mxu0 0
        %753 = vmatpush1.bf16.msra.mxu0 %v736
        %754 = vmatprep.subr.bf16.mxu0 0
        %755 = vmatpush2.bf16.msra.mxu0 0
        %756 = vmatprep.subr.bf16.mxu0 0
        %757 = vmatpush2.bf16.msra.mxu0 0
        %758 = vmatprep.subr.bf16.mxu0 0
        %759 = vmatpush2.bf16.msra.mxu0 0
        %760 = vmatprep.subr.bf16.mxu0 0
        %761 = vmatpush2.bf16.msra.mxu0 0
        %762 = vmatprep.subr.bf16.mxu0 0
        %763 = vmatpush2.bf16.msra.mxu0 0
        %764 = vmatprep.subr.bf16.mxu0 0
        %765 = vmatpush2.bf16.msra.mxu0 0
        %766 = vmatprep.subr.bf16.mxu0 0
        %767 = vmatpush2.bf16.msra.mxu0 0
        %768 = vmatprep.subr.bf16.mxu0 0
        %769 = vmatpush2.bf16.msra.mxu0 0
        %770 = vmatprep.mubr.bf16.mxu0 0
        %771 = vmatmul.mubr.bf16.gmra.mxu0 %v733
        %v772 = vpop.f32.mrf.mxu0
        %v773 = vadd.f32 0.0, %v772
        %v774 = vpop.f32.mrf.mxu0
        %v775 = vpop.f32.mrf.mxu0
        %v776 = vpop.f32.mrf.mxu0
        %777 = vdwg.mxu0
        %v778 = vpack.c.bf16 %v773, %v773
        %v780 = vunpack.c.l.b16 %v778
        %v781 = vpack.c.b16 %v780, %v780
        %782 = vrot.lane.b32.xlu0 %v781, 16
        %v783 = vpop.permute.xlu0 %782
        %vm785 = vcmask 257152
        %786 = vst.msk [vmem:[#allocation2] sm:$0xf] %vm785, %v783
        %787 = vrot.lane.b32.xlu0 %v550, 96
        %v788 = vpop.permute.xlu0 %787
        %789 = vrot.lane.b32.xlu0 %v550, 32
        %v790 = vpop.permute.xlu0 %789
        %v792 = vsel %vm555, %v788, 0
        %v795 = vsel %vm555, %v790, 0
        %797 = vmatprep.subr.bf16.mxu0 0
        %798 = vmatpush1.bf16.xpose.msra.mxu0 0
        %799 = vmatprep.subr.bf16.mxu0 0
        %800 = vmatpush1.bf16.xpose.msra.mxu0 0
        %801 = vmatprep.subr.bf16.mxu0 0
        %802 = vmatpush1.bf16.xpose.msra.mxu0 0
        %803 = vmatprep.subr.bf16.mxu0 0
        %804 = vmatpush1.bf16.xpose.msra.mxu0 0
        %805 = vmatprep.subr.bf16.mxu0 0
        %806 = vmatpush1.bf16.xpose.msra.mxu0 0
        %807 = vmatprep.subr.bf16.mxu0 0
        %808 = vmatpush1.bf16.xpose.msra.mxu0 0
        %809 = vmatprep.subr.bf16.mxu0 0
        %810 = vmatpush1.bf16.xpose.msra.mxu0 0
        %811 = vmatprep.subr.bf16.mxu0 0
        %812 = vmatpush1.bf16.xpose.msra.mxu0 %v795
        %813 = vmatprep.subr.bf16.mxu0 0
        %814 = vmatpush2.bf16.xpose.msra.mxu0 0
        %815 = vmatprep.subr.bf16.mxu0 0
        %816 = vmatpush2.bf16.xpose.msra.mxu0 0
        %817 = vmatprep.subr.bf16.mxu0 0
        %818 = vmatpush2.bf16.xpose.msra.mxu0 0
        %819 = vmatprep.subr.bf16.mxu0 0
        %820 = vmatpush2.bf16.xpose.msra.mxu0 0
        %821 = vmatprep.subr.bf16.mxu0 0
        %822 = vmatpush2.bf16.xpose.msra.mxu0 0
        %823 = vmatprep.subr.bf16.mxu0 0
        %824 = vmatpush2.bf16.xpose.msra.mxu0 0
        %825 = vmatprep.subr.bf16.mxu0 0
        %826 = vmatpush2.bf16.xpose.msra.mxu0 0
        %827 = vmatprep.subr.bf16.mxu0 0
        %828 = vmatpush2.bf16.xpose.msra.mxu0 0
        %829 = vmatprep.mubr.bf16.mxu0 0
        %830 = vmatmul.mubr.bf16.gmra.mxu0 %v792
        %v831 = vpop.f32.mrf.mxu0
        %v832 = vadd.f32 0.0, %v831
        %v833 = vpop.f32.mrf.mxu0
        %v834 = vpop.f32.mrf.mxu0
        %v835 = vpop.f32.mrf.mxu0
        %836 = vdwg.mxu0
        %v837 = vmul.f32 %v832, 0.25
        %v838 = vsel %vm603, %v837, -inf
        %839 = vmax.xlane.f32.xlu0 %v838
        %v840 = vpop.xlane.xlu0 %839
        %v841 = vsub.f32 %v837, %v840
        %v842 = vmul.f32 %v841, 1.442695
        %v843 = vpow.pop %v842
        %v844 = vsel %vm603, %v843, 0.0
        %845 = vadd.xlane.f32.xlu0 %v844
        %v846 = vpop.xlane.xlu0 %845
        %v847 = vrcp.pop %v846
        %v848 = vmul.f32 %v843, %v847
        %v849 = vpack.c.bf16 %v848, %v848
        %850 = vrot.lane.b32.xlu0 %v551, 96
        %v851 = vpop.permute.xlu0 %850
        %v853 = vsel %vm603, %v849, 0
        %v856 = vsel %vm619, %v851, 0
        %858 = vmatprep.subr.bf16.mxu0 0
        %859 = vmatpush1.bf16.msra.mxu0 0
        %860 = vmatprep.subr.bf16.mxu0 0
        %861 = vmatpush1.bf16.msra.mxu0 0
        %862 = vmatprep.subr.bf16.mxu0 0
        %863 = vmatpush1.bf16.msra.mxu0 0
        %864 = vmatprep.subr.bf16.mxu0 0
        %865 = vmatpush1.bf16.msra.mxu0 0
        %866 = vmatprep.subr.bf16.mxu0 0
        %867 = vmatpush1.bf16.msra.mxu0 0
        %868 = vmatprep.subr.bf16.mxu0 0
        %869 = vmatpush1.bf16.msra.mxu0 0
        %870 = vmatprep.subr.bf16.mxu0 0
        %871 = vmatpush1.bf16.msra.mxu0 0
        %872 = vmatprep.subr.bf16.mxu0 0
        %873 = vmatpush1.bf16.msra.mxu0 %v856
        %874 = vmatprep.subr.bf16.mxu0 0
        %875 = vmatpush2.bf16.msra.mxu0 0
        %876 = vmatprep.subr.bf16.mxu0 0
        %877 = vmatpush2.bf16.msra.mxu0 0
        %878 = vmatprep.subr.bf16.mxu0 0
        %879 = vmatpush2.bf16.msra.mxu0 0
        %880 = vmatprep.subr.bf16.mxu0 0
        %881 = vmatpush2.bf16.msra.mxu0 0
        %882 = vmatprep.subr.bf16.mxu0 0
        %883 = vmatpush2.bf16.msra.mxu0 0
        %884 = vmatprep.subr.bf16.mxu0 0
        %885 = vmatpush2.bf16.msra.mxu0 0
        %886 = vmatprep.subr.bf16.mxu0 0
        %887 = vmatpush2.bf16.msra.mxu0 0
        %888 = vmatprep.subr.bf16.mxu0 0
        %889 = vmatpush2.bf16.msra.mxu0 0
        %890 = vmatprep.mubr.bf16.mxu0 0
        %891 = vmatmul.mubr.bf16.gmra.mxu0 %v853
        %v892 = vpop.f32.mrf.mxu0
        %v893 = vadd.f32 0.0, %v892
        %v894 = vpop.f32.mrf.mxu0
        %v895 = vpop.f32.mrf.mxu0
        %v896 = vpop.f32.mrf.mxu0
        %897 = vdwg.mxu0
        %v898 = vpack.c.bf16 %v893, %v893
        %v900 = vunpack.c.l.b16 %v898
        %v901 = vpack.c.b16 %v900, %v900
        %902 = vrot.lane.b32.xlu0 %v901, 32
        %v903 = vpop.permute.xlu0 %902
        %vm905 = vcmask 388352
        %906 = vst.msk [vmem:[#allocation2] sm:$0xf] %vm905, %v903
        %907 = vrot.lane.b32.xlu0 %v550, 80
        %v908 = vpop.permute.xlu0 %907
        %909 = vrot.lane.b32.xlu0 %v550, 16
        %v910 = vpop.permute.xlu0 %909
        %v912 = vsel %vm555, %v908, 0
        %v915 = vsel %vm555, %v910, 0
        %917 = vmatprep.subr.bf16.mxu0 0
        %918 = vmatpush1.bf16.xpose.msra.mxu0 0
        %919 = vmatprep.subr.bf16.mxu0 0
        %920 = vmatpush1.bf16.xpose.msra.mxu0 0
        %921 = vmatprep.subr.bf16.mxu0 0
        %922 = vmatpush1.bf16.xpose.msra.mxu0 0
        %923 = vmatprep.subr.bf16.mxu0 0
        %924 = vmatpush1.bf16.xpose.msra.mxu0 0
        %925 = vmatprep.subr.bf16.mxu0 0
        %926 = vmatpush1.bf16.xpose.msra.mxu0 0
        %927 = vmatprep.subr.bf16.mxu0 0
        %928 = vmatpush1.bf16.xpose.msra.mxu0 0
        %929 = vmatprep.subr.bf16.mxu0 0
        %930 = vmatpush1.bf16.xpose.msra.mxu0 0
        %931 = vmatprep.subr.bf16.mxu0 0
        %932 = vmatpush1.bf16.xpose.msra.mxu0 %v915
        %933 = vmatprep.subr.bf16.mxu0 0
        %934 = vmatpush2.bf16.xpose.msra.mxu0 0
        %935 = vmatprep.subr.bf16.mxu0 0
        %936 = vmatpush2.bf16.xpose.msra.mxu0 0
        %937 = vmatprep.subr.bf16.mxu0 0
        %938 = vmatpush2.bf16.xpose.msra.mxu0 0
        %939 = vmatprep.subr.bf16.mxu0 0
        %940 = vmatpush2.bf16.xpose.msra.mxu0 0
        %941 = vmatprep.subr.bf16.mxu0 0
        %942 = vmatpush2.bf16.xpose.msra.mxu0 0
        %943 = vmatprep.subr.bf16.mxu0 0
        %944 = vmatpush2.bf16.xpose.msra.mxu0 0
        %945 = vmatprep.subr.bf16.mxu0 0
        %946 = vmatpush2.bf16.xpose.msra.mxu0 0
        %947 = vmatprep.subr.bf16.mxu0 0
        %948 = vmatpush2.bf16.xpose.msra.mxu0 0
        %949 = vmatprep.mubr.bf16.mxu0 0
        %950 = vmatmul.mubr.bf16.gmra.mxu0 %v912
        %v951 = vpop.f32.mrf.mxu0
        %v952 = vadd.f32 0.0, %v951
        %v953 = vpop.f32.mrf.mxu0
        %v954 = vpop.f32.mrf.mxu0
        %v955 = vpop.f32.mrf.mxu0
        %956 = vdwg.mxu0
        %v957 = vmul.f32 %v952, 0.25
        %v958 = vsel %vm603, %v957, -inf
        %959 = vmax.xlane.f32.xlu0 %v958
        %v960 = vpop.xlane.xlu0 %959
        %v961 = vsub.f32 %v957, %v960
        %v962 = vmul.f32 %v961, 1.442695
        %v963 = vpow.pop %v962
        %v964 = vsel %vm603, %v963, 0.0
        %965 = vadd.xlane.f32.xlu0 %v964
        %v966 = vpop.xlane.xlu0 %965
        %v967 = vrcp.pop %v966
        %v968 = vmul.f32 %v963, %v967
        %v969 = vpack.c.bf16 %v968, %v968
        %970 = vrot.lane.b32.xlu0 %v551, 80
        %v971 = vpop.permute.xlu0 %970
        %v973 = vsel %vm603, %v969, 0
        %v976 = vsel %vm619, %v971, 0
        %978 = vmatprep.subr.bf16.mxu0 0
        %979 = vmatpush1.bf16.msra.mxu0 0
        %980 = vmatprep.subr.bf16.mxu0 0
        %981 = vmatpush1.bf16.msra.mxu0 0
        %982 = vmatprep.subr.bf16.mxu0 0
        %983 = vmatpush1.bf16.msra.mxu0 0
        %984 = vmatprep.subr.bf16.mxu0 0
        %985 = vmatpush1.bf16.msra.mxu0 0
        %986 = vmatprep.subr.bf16.mxu0 0
        %987 = vmatpush1.bf16.msra.mxu0 0
        %988 = vmatprep.subr.bf16.mxu0 0
        %989 = vmatpush1.bf16.msra.mxu0 0
        %990 = vmatprep.subr.bf16.mxu0 0
        %991 = vmatpush1.bf16.msra.mxu0 0
        %992 = vmatprep.subr.bf16.mxu0 0
        %993 = vmatpush1.bf16.msra.mxu0 %v976
        %994 = vmatprep.subr.bf16.mxu0 0
        %995 = vmatpush2.bf16.msra.mxu0 0
        %996 = vmatprep.subr.bf16.mxu0 0
        %997 = vmatpush2.bf16.msra.mxu0 0
        %998 = vmatprep.subr.bf16.mxu0 0
        %999 = vmatpush2.bf16.msra.mxu0 0
        %1000 = vmatprep.subr.bf16.mxu0 0
        %1001 = vmatpush2.bf16.msra.mxu0 0
        %1002 = vmatprep.subr.bf16.mxu0 0
        %1003 = vmatpush2.bf16.msra.mxu0 0
        %1004 = vmatprep.subr.bf16.mxu0 0
        %1005 = vmatpush2.bf16.msra.mxu0 0
        %1006 = vmatprep.subr.bf16.mxu0 0
        %1007 = vmatpush2.bf16.msra.mxu0 0
        %1008 = vmatprep.subr.bf16.mxu0 0
        %1009 = vmatpush2.bf16.msra.mxu0 0
        %1010 = vmatprep.mubr.bf16.mxu0 0
        %1011 = vmatmul.mubr.bf16.gmra.mxu0 %v973
        %v1012 = vpop.f32.mrf.mxu0
        %v1013 = vadd.f32 0.0, %v1012
        %v1014 = vpop.f32.mrf.mxu0
        %v1015 = vpop.f32.mrf.mxu0
        %v1016 = vpop.f32.mrf.mxu0
        %1017 = vdwg.mxu0
        %v1018 = vpack.c.bf16 %v1013, %v1013
        %v1020 = vunpack.c.l.b16 %v1018
        %v1021 = vpack.c.b16 %v1020, %v1020
        %1022 = vrot.lane.b32.xlu0 %v1021, 48
        %v1023 = vpop.permute.xlu0 %1022
        %vm1025 = vcmask 519552
        %1026 = vst.msk [vmem:[#allocation2] sm:$0xf] %vm1025, %v1023
        %v1027 = vld [vmem:[#allocation2] sm:$0xf]
        %v1028 = vld [vmem:[%s5] sm:$0xf]
        %v1029 = vld [vmem:[%s5 + $0x4] sm:$0xf]
        %v1030 = vld [vmem:[%s5 + $0x8] sm:$0xf]
        %v1031 = vld [vmem:[%s5 + $0xc] sm:$0xf]
        %v1032 = vld [vmem:[%s5 + $0x10] sm:$0xf]
        %v1033 = vld [vmem:[%s5 + $0x14] sm:$0xf]
        %v1034 = vld [vmem:[%s5 + $0x18] sm:$0xf]
        %v1035 = vld [vmem:[%s5 + $0x1c] sm:$0xf]
        %v1036 = vld [vmem:[%s6] sm:$0x1]
        %v1038 = vlaneseq
        %v1039 = vshrl.u32 %v1038, 7
        %v1040 = vsub.s32 0, %v1039
        %v1041 = vrot.slane %v1036, %v1040
        %v1051 = vunpack.c.l.b16 %v1028
        %v1052 = vunpack.c.l.b16 %v1029
        %v1053 = vunpack.c.l.b16 %v1030
        %v1054 = vunpack.c.l.b16 %v1031
        %v1055 = vunpack.c.l.b16 %v1032
        %v1056 = vunpack.c.l.b16 %v1033
        %v1057 = vunpack.c.l.b16 %v1034
        %v1058 = vunpack.c.l.b16 %v1035
        %v1059 = vpack.c.b16 %v1052, %v1051
        %v1060 = vpack.c.b16 %v1054, %v1053
        %v1061 = vpack.c.b16 %v1056, %v1055
        %v1062 = vpack.c.b16 %v1058, %v1057
        %vm1067 = vcmask 523264
        %v1069 = vsel %vm1067, %v1027, 0
        %1071 = vmatprep.subr.bf16.mxu0 0
        %1072 = vmatpush1.bf16.msra.mxu0 0
        %1073 = vmatprep.subr.bf16.mxu0 0
        %1074 = vmatpush1.bf16.msra.mxu0 0
        %1075 = vmatprep.subr.bf16.mxu0 0
        %1076 = vmatpush1.bf16.msra.mxu0 0
        %1077 = vmatprep.subr.bf16.mxu0 0
        %1078 = vmatpush1.bf16.msra.mxu0 0
        %1079 = vmatprep.subr.bf16.mxu0 0
        %1080 = vmatpush1.bf16.msra.mxu0 %v1062
        %1081 = vmatprep.subr.bf16.mxu0 0
        %1082 = vmatpush1.bf16.msra.mxu0 %v1061
        %1083 = vmatprep.subr.bf16.mxu0 0
        %1084 = vmatpush1.bf16.msra.mxu0 %v1060
        %1085 = vmatprep.subr.bf16.mxu0 0
        %1086 = vmatpush1.bf16.msra.mxu0 %v1059
        %1087 = vmatprep.subr.bf16.mxu0 0
        %1088 = vmatpush2.bf16.msra.mxu0 0
        %1089 = vmatprep.subr.bf16.mxu0 0
        %1090 = vmatpush2.bf16.msra.mxu0 0
        %1091 = vmatprep.subr.bf16.mxu0 0
        %1092 = vmatpush2.bf16.msra.mxu0 0
        %1093 = vmatprep.subr.bf16.mxu0 0
        %1094 = vmatpush2.bf16.msra.mxu0 0
        %1095 = vmatprep.subr.bf16.mxu0 0
        %1096 = vmatpush2.bf16.msra.mxu0 0
        %1097 = vmatprep.subr.bf16.mxu0 0
        %1098 = vmatpush2.bf16.msra.mxu0 0
        %1099 = vmatprep.subr.bf16.mxu0 0
        %1100 = vmatpush2.bf16.msra.mxu0 0
        %1101 = vmatprep.subr.bf16.mxu0 0
        %1102 = vmatpush2.bf16.msra.mxu0 0
        %1103 = vmatprep.mubr.bf16.mxu0 0
        %1104 = vmatmul.mubr.bf16.gmra.mxu0 %v1069
        %v1105 = vpop.f32.mrf.mxu0
        %v1106 = vadd.f32 %v1041, %v1105
        %v1107 = vpop.f32.mrf.mxu0
        %v1108 = vpop.f32.mrf.mxu0
        %v1109 = vpop.f32.mrf.mxu0
        %1110 = vdwg.mxu0
        %v1111 = vadd.f32 %v437, %v1106
        %v1112 = vld [vmem:[%s7] sm:$0x1]
        %v1113 = vld [vmem:[%s8] sm:$0x1]
        %v1114 = vsel %vm440, %v1111, 0.0
        %1115 = vadd.xlane.f32.xlu0 %v1114
        %v1116 = vpop.xlane.xlu0 %1115
        %v1117 = vmul.f32 %v1116, %v444
        %v1118 = vsub.f32 %v1111, %v1117
        %v1119 = vmul.f32 %v1118, %v1118
        %v1120 = vsel %vm440, %v1119, 0.0
        %1121 = vadd.xlane.f32.xlu0 %v1120
        %v1122 = vpop.xlane.xlu0 %1121
        %v1123 = vmul.f32 %v1122, %v444
        %v1124 = vadd.f32 %v1123, 1e-05
        %v1125 = vrsqrt.pop %v1124
        %v1126 = vmul.f32 %v1118, %v1125
        %v1128 = vlaneseq
        %v1129 = vshrl.u32 %v1128, 7
        %v1130 = vsub.s32 0, %v1129
        %v1131 = vrot.slane %v1112, %v1130
        %v1133 = vmul.f32 %v1126, %v1131
        %v1135 = vlaneseq
        %v1136 = vshrl.u32 %v1135, 7
        %v1137 = vsub.s32 0, %v1136
        %v1138 = vrot.slane %v1113, %v1137
        %v1140 = vadd.f32 %v1133, %v1138
        %v1141 = vpack.c.bf16 %v1140, %v1140
        %v1142 = vld [vmem:[%s9] sm:$0xf]
        %v1143 = vld [vmem:[%s9 + $0x4] sm:$0xf]
        %v1144 = vld [vmem:[%s9 + $0x8] sm:$0xf]
        %v1145 = vld [vmem:[%s9 + $0xc] sm:$0xf]
        %v1146 = vld [vmem:[%s10] sm:$0x1]
        %v1148 = vlaneseq
        %v1149 = vshrl.u32 %v1148, 7
        %v1150 = vsub.s32 0, %v1149
        %v1151 = vrot.slane %v1146, %v1150
        %v1157 = vunpack.c.l.b16 %v1142
        %v1158 = vunpack.c.l.b16 %v1143
        %v1159 = vunpack.c.l.b16 %v1144
        %v1160 = vunpack.c.l.b16 %v1145
        %v1161 = vpack.c.b16 %v1158, %v1157
        %v1162 = vpack.c.b16 %v1160, %v1159
        %v1166 = vsel %vm440, %v1141, 0
        %1168 = vmatprep.subr.bf16.mxu0 0
        %1169 = vmatpush1.bf16.msra.mxu0 0
        %1170 = vmatprep.subr.bf16.mxu0 0
        %1171 = vmatpush1.bf16.msra.mxu0 0
        %1172 = vmatprep.subr.bf16.mxu0 0
        %1173 = vmatpush1.bf16.msra.mxu0 0
        %1174 = vmatprep.subr.bf16.mxu0 0
        %1175 = vmatpush1.bf16.msra.mxu0 0
        %1176 = vmatprep.subr.bf16.mxu0 0
        %1177 = vmatpush1.bf16.msra.mxu0 0
        %1178 = vmatprep.subr.bf16.mxu0 0
        %1179 = vmatpush1.bf16.msra.mxu0 0
        %1180 = vmatprep.subr.bf16.mxu0 0
        %1181 = vmatpush1.bf16.msra.mxu0 %v1162
        %1182 = vmatprep.subr.bf16.mxu0 0
        %1183 = vmatpush1.bf16.msra.mxu0 %v1161
        %1184 = vmatprep.subr.bf16.mxu0 0
        %1185 = vmatpush2.bf16.msra.mxu0 0
        %1186 = vmatprep.subr.bf16.mxu0 0
        %1187 = vmatpush2.bf16.msra.mxu0 0
        %1188 = vmatprep.subr.bf16.mxu0 0
        %1189 = vmatpush2.bf16.msra.mxu0 0
        %1190 = vmatprep.subr.bf16.mxu0 0
        %1191 = vmatpush2.bf16.msra.mxu0 0
        %1192 = vmatprep.subr.bf16.mxu0 0
        %1193 = vmatpush2.bf16.msra.mxu0 0
        %1194 = vmatprep.subr.bf16.mxu0 0
        %1195 = vmatpush2.bf16.msra.mxu0 0
        %1196 = vmatprep.subr.bf16.mxu0 0
        %1197 = vmatpush2.bf16.msra.mxu0 0
        %1198 = vmatprep.subr.bf16.mxu0 0
        %1199 = vmatpush2.bf16.msra.mxu0 0
        %1200 = vmatprep.mubr.bf16.mxu0 0
        %1201 = vmatmul.mubr.bf16.gmra.mxu0 %v1166
        %v1202 = vpop.f32.mrf.mxu0
        %v1203 = vadd.f32 %v1151, %v1202
        %v1204 = vpop.f32.mrf.mxu0
        %v1205 = vpop.f32.mrf.mxu0
        %v1206 = vpop.f32.mrf.mxu0
        %1207 = vdwg.mxu0
        %vm1208 = vcmp.gt.f32.partialorder %v1203, 0.0
        %v1209 = vmul.f32 %v1203, 0.01
        %v1210 = vsel %vm1208, %v1203, %v1209
        %v1211 = vpack.c.bf16 %v1210, %v1210
        %v1212 = vld [vmem:[%s11] sm:$0xf]
        %v1213 = vld [vmem:[%s11 + $0x4] sm:$0xf]
        %v1214 = vld [vmem:[%s11 + $0x8] sm:$0xf]
        %v1215 = vld [vmem:[%s11 + $0xc] sm:$0xf]
        %v1216 = vld [vmem:[%s11 + $0x10] sm:$0xf]
        %v1217 = vld [vmem:[%s11 + $0x14] sm:$0xf]
        %v1218 = vld [vmem:[%s11 + $0x18] sm:$0xf]
        %v1219 = vld [vmem:[%s11 + $0x1c] sm:$0xf]
        %v1220 = vld [vmem:[%s11 + $0x20] sm:$0xf]
        %v1221 = vld [vmem:[%s11 + $0x24] sm:$0xf]
        %v1222 = vld [vmem:[%s11 + $0x28] sm:$0xf]
        %v1223 = vld [vmem:[%s11 + $0x2c] sm:$0xf]
        %v1224 = vld [vmem:[%s11 + $0x30] sm:$0xf]
        %v1225 = vld [vmem:[%s11 + $0x34] sm:$0xf]
        %v1226 = vld [vmem:[%s11 + $0x38] sm:$0xf]
        %v1227 = vld [vmem:[%s11 + $0x3c] sm:$0xf]
        %v1228 = vld [vmem:[%s12] sm:$0x1]
        %v1230 = vlaneseq
        %v1231 = vshrl.u32 %v1230, 7
        %v1232 = vsub.s32 0, %v1231
        %v1233 = vrot.slane %v1228, %v1232
        %v1251 = vunpack.c.l.b16 %v1212
        %v1252 = vunpack.c.l.b16 %v1213
        %v1253 = vunpack.c.l.b16 %v1214
        %v1254 = vunpack.c.l.b16 %v1215
        %v1255 = vunpack.c.l.b16 %v1216
        %v1256 = vunpack.c.l.b16 %v1217
        %v1257 = vunpack.c.l.b16 %v1218
        %v1258 = vunpack.c.l.b16 %v1219
        %v1259 = vunpack.c.l.b16 %v1220
        %v1260 = vunpack.c.l.b16 %v1221
        %v1261 = vunpack.c.l.b16 %v1222
        %v1262 = vunpack.c.l.b16 %v1223
        %v1263 = vunpack.c.l.b16 %v1224
        %v1264 = vunpack.c.l.b16 %v1225
        %v1265 = vunpack.c.l.b16 %v1226
        %v1266 = vunpack.c.l.b16 %v1227
        %v1267 = vpack.c.b16 %v1252, %v1251
        %v1268 = vpack.c.b16 %v1254, %v1253
        %v1269 = vpack.c.b16 %v1256, %v1255
        %v1270 = vpack.c.b16 %v1258, %v1257
        %v1271 = vpack.c.b16 %v1260, %v1259
        %v1272 = vpack.c.b16 %v1262, %v1261
        %v1273 = vpack.c.b16 %v1264, %v1263
        %v1274 = vpack.c.b16 %v1266, %v1265
        %1283 = vmatprep.subr.bf16.mxu0 0
        %1284 = vmatpush1.bf16.msra.mxu0 %v1274
        %1285 = vmatprep.subr.bf16.mxu0 0
        %1286 = vmatpush1.bf16.msra.mxu0 %v1273
        %1287 = vmatprep.subr.bf16.mxu0 0
        %1288 = vmatpush1.bf16.msra.mxu0 %v1272
        %1289 = vmatprep.subr.bf16.mxu0 0
        %1290 = vmatpush1.bf16.msra.mxu0 %v1271
        %1291 = vmatprep.subr.bf16.mxu0 0
        %1292 = vmatpush1.bf16.msra.mxu0 %v1270
        %1293 = vmatprep.subr.bf16.mxu0 0
        %1294 = vmatpush1.bf16.msra.mxu0 %v1269
        %1295 = vmatprep.subr.bf16.mxu0 0
        %1296 = vmatpush1.bf16.msra.mxu0 %v1268
        %1297 = vmatprep.subr.bf16.mxu0 0
        %1298 = vmatpush1.bf16.msra.mxu0 %v1267
        %1299 = vmatprep.subr.bf16.mxu0 0
        %1300 = vmatpush2.bf16.msra.mxu0 0
        %1301 = vmatprep.subr.bf16.mxu0 0
        %1302 = vmatpush2.bf16.msra.mxu0 0
        %1303 = vmatprep.subr.bf16.mxu0 0
        %1304 = vmatpush2.bf16.msra.mxu0 0
        %1305 = vmatprep.subr.bf16.mxu0 0
        %1306 = vmatpush2.bf16.msra.mxu0 0
        %1307 = vmatprep.subr.bf16.mxu0 0
        %1308 = vmatpush2.bf16.msra.mxu0 0
        %1309 = vmatprep.subr.bf16.mxu0 0
        %1310 = vmatpush2.bf16.msra.mxu0 0
        %1311 = vmatprep.subr.bf16.mxu0 0
        %1312 = vmatpush2.bf16.msra.mxu0 0
        %1313 = vmatprep.subr.bf16.mxu0 0
        %1314 = vmatpush2.bf16.msra.mxu0 0
        %1315 = vmatprep.mubr.bf16.mxu0 0
        %1316 = vmatmul.mubr.bf16.gmra.mxu0 %v1211
        %v1317 = vpop.f32.mrf.mxu0
        %v1318 = vadd.f32 %v1233, %v1317
        %v1319 = vpop.f32.mrf.mxu0
        %v1320 = vpop.f32.mrf.mxu0
        %v1321 = vpop.f32.mrf.mxu0
        %1322 = vdwg.mxu0
        %v1323 = vadd.f32 %v1111, %v1318
        %1324 = vst.msk [vmem:[%s431] sm:$0xff] %vm440, %v1323
        %s1325 = sand.u32 %s313, 1
        %s1326 = scalar_lea.sflag [#allocation4], %s1325
        %s1327 = sand.u32 %s313, 1
        %s1328 = smul.addr %s1327, 8
        %s1329 = scalar_lea.vmem [#allocation3], %s1328
        // Predicated region
        $region73: #{vit_block.1} parent=71 // pred_check
          %p1330 = pneg %p323
        $region74: #{vit_block.1} parent=71 // pred_check_branch
          %1332 = sbr.rel (%p1330) target = $region76
        $region75: #{vit_block.1} parent=71 // pred_region
          %s1334 = ssub.s32 128, 128
          %1335 = vsyncadd %s1326, %s1334
          %s1336 = smul.addr %s27, 128
          %s1337 = scalar_lea.hbm %s13, %s1336
          %s1339 = sshll.u32 %s1329, 4
          %s1340 = int_to_ptr.vmem [resolvable:$true] %s1339
          %1342 = dma.vmem_to_hbm [thread:$0]  %s1340, 128, %s1337, %s1326
        $region76: #{vit_block.1} parent=71 // pred_fallthru
          _
      $region72: #{vit_block.1} parent=5 // pred_fallthru
        _
      %p1343 = scmp.le.s32.totalorder 2, %s22
      // Predicated region
      $region77: #{vit_block.1} parent=5 // pred_check
        %p1344 = pneg %p1343
      $region78: #{vit_block.1} parent=5 // pred_check_branch
        %1346 = sbr.rel (%p1344) target = $region80
      $region79: #{vit_block.1} parent=5 // pred_region
        %s1347 = ssub.s32 %s22, 2
        // Predicated region
        $region81: #{vit_block.1} parent=79 // pred_check
          %p1348 = pneg %p329
        $region82: #{vit_block.1} parent=79 // pred_check_branch
          %1350 = sbr.rel (%p1348) target = $region84
        $region83: #{vit_block.1} parent=79 // pred_region
          %s1351 = sand.u32 %s314, 1
          %s1352 = scalar_lea.sflag [#allocation4], %s1351
          %s1353 = sand.u32 %s314, 1
          %s1354 = smul.addr %s1353, 8
          %s1355 = scalar_lea.vmem [#allocation3], %s1354
          %1356 = dma.done %s1352, 128
        $region84: #{vit_block.1} parent=79 // pred_fallthru
          _
      $region80: #{vit_block.1} parent=5 // pred_fallthru
        _
    $region6: #{vit_block.1} parent=1 // loop_footer
      %s26 = sadd.s32 1, %s22
    $region7: #{vit_block.1} parent=1 // loop_footer_branch
      %21 = sbr.rel target = $region3
    $region8: #{vit_block.1} parent=1 // loop_exit
      _
    %1357 = vsyncpa [#allocation4], 1
    %s1358 = scalar_lea.sflag [#allocation4], 1
    %1359 = vsyncpa %s1358, 1

</llo_original>
